<compile_context>
chip_gen: v6e
topology: v6e:2x2x1
jax: 0.10.0
libtpu: 0.0.40
codegen_flags: <defaults>
</compile_context>

<pallas_src>
import jax
import jax.numpy as jnp
from jax import lax
from jax.experimental import pallas as pl
from jax.experimental.pallas import tpu as pltpu


# ---------------------------------------------------------------------------
# Kernel 1: fused [theta | g] projection (channels-last) + phi (channels-first).
# ---------------------------------------------------------------------------
def _qkv_proj_kernel(x_ref, wtg_ref, btg_ref, wp_ref, bp_ref, tg_ref, ph_ref):
    # x block: (1, C, TM), channels-first.  Cast to bf16 before any layout
    # change; both matmuls contract over C = dim 0 of x so Mosaic picks the
    # lowering of the transposed operand (no explicit f32 XLU transpose).
    x_bf = x_ref[0].astype(jnp.bfloat16)                                # (C, TM)
    tg = lax.dot_general(x_bf, wtg_ref[...], (((0,), (0,)), ((), ())),
                         preferred_element_type=jnp.float32) + btg_ref[...]
    tg_ref[0] = tg.astype(tg_ref.dtype)                                 # (TM, 2*IC)
    # phi channels-first: (IC, TM) = W_phi^T @ x, again contracting C (dim 0).
    ph = lax.dot_general(wp_ref[...], x_bf, (((0,), (0,)), ((), ())),
                         preferred_element_type=jnp.float32) + bp_ref[...]
    ph_ref[0] = ph.astype(ph_ref.dtype)                                 # (IC, TM)


# ---------------------------------------------------------------------------
# Shared epilogue: deferred softmax normalization + W (1x1x1 conv) + folded BN
# + residual, all channels-first.  Transposes the small bf16 (TQ, IC) y tile.
# ---------------------------------------------------------------------------
def _attn_epilogue(acc, inv_l, x_ref, ww_ref, bw_ref, scale_ref, shift_ref, o_ref):
    y_t = jnp.transpose((acc * inv_l).astype(jnp.bfloat16))             # (IC, TQ)
    w_y_t = lax.dot_general(ww_ref[...], y_t, (((0,), (0,)), ((), ())),
                            preferred_element_type=jnp.float32)         # (C, TQ)
    w_y_t = (w_y_t + bw_ref[...]) * scale_ref[...] + shift_ref[...]
    o_ref[0] = (x_ref[0] + w_y_t).astype(o_ref.dtype)


# ---------------------------------------------------------------------------
# Kernel 2a: flash-style online-softmax attention (multi-step key axis).
# ---------------------------------------------------------------------------
def _nl_attention_flash_kernel(th_ref, ph_ref, g_ref, x_ref, ww_ref, bw_ref,
                               scale_ref, shift_ref, o_ref, m_sc, l_sc, acc_sc):
    ki = pl.program_id(2)

    @pl.when(ki == 0)
    def _init():
        m_sc[...] = jnp.full_like(m_sc, -jnp.inf)
        l_sc[...] = jnp.zeros_like(l_sc)
        acc_sc[...] = jnp.zeros_like(acc_sc)

    theta = th_ref[0]                                   # (TQ, IC) bf16
    phi_cf = ph_ref[0]                                  # (IC, TK) bf16, channels-first
    # Plain (TQ,IC)x(IC,TK) dot: no transposed contraction in the hot k loop.
    s = jnp.dot(theta, phi_cf, preferred_element_type=jnp.float32)      # (TQ, TK)

    m_prev = m_sc[...]
    m_new = jnp.maximum(m_prev, jnp.max(s, axis=-1, keepdims=True))
    alpha = jnp.exp(m_prev - m_new)                                      # (TQ, 1) f32
    # exp on the bf16 EUP path (v6e/v7x); l/acc accumulation stays in f32.
    p = jnp.exp((s - m_new).astype(jnp.bfloat16))                        # (TQ, TK) bf16
    l_sc[...] = alpha * l_sc[...] + jnp.sum(p.astype(jnp.float32),
                                            axis=-1, keepdims=True)
    acc_sc[...] = alpha * acc_sc[...] + jnp.dot(
        p, g_ref[0], preferred_element_type=jnp.float32)
    m_sc[...] = m_new

    @pl.when(ki == pl.num_programs(2) - 1)
    def _finalize():
        inv_l = pl.reciprocal(l_sc[...], approx=True)
        _attn_epilogue(acc_sc[...], inv_l, x_ref, ww_ref, bw_ref,
                       scale_ref, shift_ref, o_ref)


# ---------------------------------------------------------------------------
# Kernel 2b: single-pass attention (key axis collapsed, small N): no scratch,
# no online-softmax recurrence, no per-step rescaling.
# ---------------------------------------------------------------------------
def _nl_attention_single_kernel(th_ref, ph_ref, g_ref, x_ref, ww_ref, bw_ref,
                                scale_ref, shift_ref, o_ref):
    theta = th_ref[0]                                   # (TQ, IC) bf16
    phi_cf = ph_ref[0]                                  # (IC, N)  bf16
    s = jnp.dot(theta, phi_cf, preferred_element_type=jnp.float32)      # (TQ, N)
    m = jnp.max(s, axis=-1, keepdims=True)
    p = jnp.exp((s - m).astype(jnp.bfloat16))                            # (TQ, N) bf16
    l = jnp.sum(p.astype(jnp.float32), axis=-1, keepdims=True)
    acc = jnp.dot(p, g_ref[0], preferred_element_type=jnp.float32)       # (TQ, IC)
    inv_l = pl.reciprocal(l, approx=True)
    _attn_epilogue(acc, inv_l, x_ref, ww_ref, bw_ref, scale_ref, shift_ref, o_ref)


# ---------------------------------------------------------------------------
# Wrapper.
# ---------------------------------------------------------------------------
def _pick_tile(n, prefs):
    for t in prefs:
        if t <= n and n % t == 0:
            return t
    return n


def _device_is_v5e():
    try:
        kind = jax.devices()[0].device_kind.lower()
    except Exception:
        return False
    return ("v5 lite" in kind) or ("v5e" in kind) or ("v5litepod" in kind)


def _vmem_limit_bytes():
    phys = 64 * 1024 * 1024                      # conservative default (v7x)
    try:
        phys = int(pltpu.get_tpu_info().vmem_capacity_bytes)
    except Exception:
        pass
    # 56 MiB on v7x (64 MiB physical), ~100 MiB on v5e/v6e (128 MiB physical).
    return min(phys - 8 * 1024 * 1024, 100 * 1024 * 1024)


def nonlocal_block(x, params, *, tm=None, tq=None, tk=None):
    """NonLocalBlock forward.  x: (b, c, t, h, w) float32 -> same shape."""
    b, c, t, h, w = x.shape
    n = t * h * w
    ic = params["wt_t"].shape[1]

    is_v5e = _device_is_v5e()
    qk_prefs = (256, 128) if is_v5e else (512, 256, 128)

    tm = tm or _pick_tile(n, (512, 256, 128))
    tq_given = tq is not None
    tq = tq or _pick_tile(n, qk_prefs)
    if tk is None:
        # Small N: collapse the key axis entirely (single-pass kernel).
        collapse_cap = 512 if is_v5e else 1024
        tk = n if n <= collapse_cap else _pick_tile(n, qk_prefs)
    if is_v5e and not tq_given:
        # Bound the per-step (TQ, TK) f32 score tile to <= 64 vregs on v5e so
        # the max/sub/exp/sum chain does not spill (128x128 MXU, 1 vst slot).
        while tq > 128 and tq * tk > 128 * 512:
            tq //= 2

    assert c % 8 == 0 and ic % 128 == 0, "channel dims must be lane/sublane aligned"
    assert n % tm == 0 and n % tq == 0 and n % tk == 0, (
        "N = t*h*w must be divisible by the chosen tiles (pad N or pass tm/tq/tk)")

    # Channels-first flattening is a free reshape (no HBM transpose pass).
    x_cn = x.reshape(b, c, n)

    # Fused [theta | g] weight, phi weight (bf16 for the MXU), f32 biases.
    w_tg = jnp.concatenate([params["wt_t"], params["wg_t"]],
                           axis=1).astype(jnp.bfloat16)                 # (C, 2*IC)
    b_tg = jnp.concatenate([params["bt"], params["bg"]], axis=1)        # (1, 2*IC)
    w_ph = params["wp_t"].astype(jnp.bfloat16)                           # (C, IC)
    b_ph = params["bp"].reshape(ic, 1)                                   # (IC, 1)
    ww = params["ww_t"].astype(jnp.bfloat16)                             # (IC, C)
    bw = params["bw"].reshape(c, 1)
    bn_scale = params["bn_scale"].reshape(c, 1)
    bn_shift = params["bn_shift"].reshape(c, 1)

    vmem_limit = _vmem_limit_bytes()

    # --- kernel 1: projections -------------------------------------------------
    theta_g, phi_cf = pl.pallas_call(
        _qkv_proj_kernel,
        out_shape=(
            jax.ShapeDtypeStruct((b, n, 2 * ic), jnp.bfloat16),   # [theta | g]
            jax.ShapeDtypeStruct((b, ic, n), jnp.bfloat16),       # phi, channels-first
        ),
        grid_spec=pltpu.PrefetchScalarGridSpec(
            num_scalar_prefetch=0,
            grid=(b, n // tm),
            in_specs=[
                pl.BlockSpec((1, c, tm), lambda i, j: (i, 0, j)),
                pl.BlockSpec((c, 2 * ic), lambda i, j: (0, 0)),
                pl.BlockSpec((1, 2 * ic), lambda i, j: (0, 0)),
                pl.BlockSpec((c, ic), lambda i, j: (0, 0)),
                pl.BlockSpec((ic, 1), lambda i, j: (0, 0)),
            ],
            out_specs=[
                pl.BlockSpec((1, tm, 2 * ic), lambda i, j: (i, j, 0)),
                pl.BlockSpec((1, ic, tm), lambda i, j: (i, 0, j)),
            ],
        ),
        compiler_params=pltpu.CompilerParams(
            dimension_semantics=("parallel", "parallel"),
            vmem_limit_bytes=vmem_limit),
        cost_estimate=pl.CostEstimate(
            flops=int(2 * b * n * c * 3 * ic),
            transcendentals=0,
            bytes_accessed=int(b * c * n * 4 + (w_tg.size + w_ph.size) * 2
                               + 3 * b * n * ic * 2)),
    )(x_cn, w_tg, b_tg, w_ph, b_ph)

    # --- kernel 2: attention + W + BN + residual --------------------------------
    nq, nk = n // tq, n // tk
    attn_flops = int(b * (4 * n * n * ic + 2 * n * ic * c))
    attn_bytes = int(b * n * ic * 2              # theta, read once
                     + 2 * b * n * ic * 2 * nq   # phi + g, restreamed per q tile
                     + 2 * b * c * n * 4)        # x residual in + z out
    attn_trans = int(b * n * n)

    if nk == 1:
        out_cn = pl.pallas_call(
            _nl_attention_single_kernel,
            out_shape=jax.ShapeDtypeStruct((b, c, n), x.dtype),
            grid_spec=pltpu.PrefetchScalarGridSpec(
                num_scalar_prefetch=0,
                grid=(b, nq),
                in_specs=[
                    pl.BlockSpec((1, tq, ic), lambda bi, qi: (bi, qi, 0)),  # theta
                    pl.BlockSpec((1, ic, n), lambda bi, qi: (bi, 0, 0)),    # phi (all keys)
                    pl.BlockSpec((1, n, ic), lambda bi, qi: (bi, 0, 1)),    # g (all keys)
                    pl.BlockSpec((1, c, tq), lambda bi, qi: (bi, 0, qi)),   # x residual
                    pl.BlockSpec((ic, c), lambda bi, qi: (0, 0)),           # W weight
                    pl.BlockSpec((c, 1), lambda bi, qi: (0, 0)),            # W bias
                    pl.BlockSpec((c, 1), lambda bi, qi: (0, 0)),            # BN scale
                    pl.BlockSpec((c, 1), lambda bi, qi: (0, 0)),            # BN shift
                ],
                out_specs=pl.BlockSpec((1, c, tq), lambda bi, qi: (bi, 0, qi)),
            ),
            compiler_params=pltpu.CompilerParams(
                dimension_semantics=("parallel", "parallel"),
                vmem_limit_bytes=vmem_limit),
            cost_estimate=pl.CostEstimate(
                flops=attn_flops, transcendentals=attn_trans,
                bytes_accessed=attn_bytes),
        )(theta_g, phi_cf, theta_g, x_cn, ww, bw, bn_scale, bn_shift)
    else:
        out_cn = pl.pallas_call(
            _nl_attention_flash_kernel,
            out_shape=jax.ShapeDtypeStruct((b, c, n), x.dtype),
            grid_spec=pltpu.PrefetchScalarGridSpec(
                num_scalar_prefetch=0,
                grid=(b, nq, nk),
                in_specs=[
                    pl.BlockSpec((1, tq, ic), lambda bi, qi, ki: (bi, qi, 0)),  # theta
                    pl.BlockSpec((1, ic, tk), lambda bi, qi, ki: (bi, 0, ki)),  # phi
                    pl.BlockSpec((1, tk, ic), lambda bi, qi, ki: (bi, ki, 1)),  # g
                    pl.BlockSpec((1, c, tq), lambda bi, qi, ki: (bi, 0, qi)),   # x residual
                    pl.BlockSpec((ic, c), lambda bi, qi, ki: (0, 0)),           # W weight
                    pl.BlockSpec((c, 1), lambda bi, qi, ki: (0, 0)),            # W bias
                    pl.BlockSpec((c, 1), lambda bi, qi, ki: (0, 0)),            # BN scale
                    pl.BlockSpec((c, 1), lambda bi, qi, ki: (0, 0)),            # BN shift
                ],
                out_specs=pl.BlockSpec((1, c, tq), lambda bi, qi, ki: (bi, 0, qi)),
                scratch_shapes=[
                    pltpu.VMEM((tq, 1), jnp.float32),    # running max
                    pltpu.VMEM((tq, 1), jnp.float32),    # running sum
                    pltpu.VMEM((tq, ic), jnp.float32),   # output accumulator
                ],
            ),
            compiler_params=pltpu.CompilerParams(
                dimension_semantics=("parallel", "parallel", "arbitrary"),
                vmem_limit_bytes=vmem_limit),
            cost_estimate=pl.CostEstimate(
                flops=attn_flops, transcendentals=attn_trans,
                bytes_accessed=attn_bytes),
        )(theta_g, phi_cf, theta_g, x_cn, ww, bw, bn_scale, bn_shift)

    return out_cn.reshape(b, c, t, h, w)


# ---------------------------------------------------------------------------
# Pure-JAX f32 reference matching the PyTorch forward exactly.
# ---------------------------------------------------------------------------
def _reference(x, params):
    b, c, t, h, w = x.shape
    n = t * h * w
    x_flat = jnp.transpose(x.reshape(b, c, n), (0, 2, 1))            # (b, N, C)
    theta = x_flat @ params["wt_t"] + params["bt"]                   # (b, N, IC)
    phi = x_flat @ params["wp_t"] + params["bp"]                     # (b, N, IC)
    g = x_flat @ params["wg_t"] + params["bg"]                       # (b, N, IC)
    f = jnp.einsum("bnk,bmk->bnm", theta, phi)                       # (b, N, N)
    f_div_c = jax.nn.softmax(f, axis=-1)
    y = jnp.einsum("bnm,bmk->bnk", f_div_c, g)                       # (b, N, IC)
    w_y = y @ params["ww_t"] + params["bw"]                          # (b, N, C)
    w_y = w_y * params["bn_scale"] + params["bn_shift"]
    z = w_y + x_flat
    return jnp.transpose(z, (0, 2, 1)).reshape(b, c, t, h, w)


def make_params(key, in_channels, inter_channels):
    """Deterministic parameters matching the module's shapes.

    The PyTorch __init__ zeroes the BatchNorm gamma/beta (so z == x at init).
    Nonzero deterministic values are used here so the full kernel path is
    exercised; BN is modeled in eval mode with running_mean=0, running_var=1
    folded into a per-channel affine scale/shift.
    """
    c, ic = in_channels, inter_channels
    keys = jax.random.split(key, 8)
    eps = 1e-5
    gamma = jax.random.normal(keys[5], (1, c), jnp.float32) * 0.1
    beta = jax.random.normal(keys[6], (1, c), jnp.float32) * 0.1
    running_mean = jnp.zeros((1, c), jnp.float32)
    running_var = jnp.ones((1, c), jnp.float32)
    scale = gamma / jnp.sqrt(running_var + eps)
    shift = beta - running_mean * scale
    s = 0.05
    return {
        # 1x1x1 conv weights stored pre-transposed: (C_in, C_out)
        "wt_t": jax.random.normal(keys[0], (c, ic), jnp.float32) * s,
        "bt": jax.random.normal(keys[1], (1, ic), jnp.float32) * s,
        "wp_t": jax.random.normal(keys[2], (c, ic), jnp.float32) * s,
        "bp": jax.random.normal(keys[3], (1, ic), jnp.float32) * s,
        "wg_t": jax.random.normal(keys[4], (c, ic), jnp.float32) * s,
        "bg": jax.random.normal(keys[7], (1, ic), jnp.float32) * s,
        "ww_t": jax.random.normal(jax.random.fold_in(key, 100), (ic, c), jnp.float32) * s,
        "bw": jax.random.normal(jax.random.fold_in(key, 101), (1, c), jnp.float32) * s,
        "bn_scale": scale,
        "bn_shift": shift,
    }


if __name__ == "__main__":
    key = jax.random.PRNGKey(0)
    # Small but lane-aligned shapes: C=256, IC=C//2=128 (module default),
    # N = t*h*w = 512.
    b, c, t, h, w = 2, 256, 2, 16, 16
    inter_channels = c // 2

    kx, kp = jax.random.split(key)
    x = jax.random.normal(kx, (b, c, t, h, w), jnp.float32)
    params = make_params(kp, c, inter_channels)

    z_ref = jax.block_until_ready(_reference(x, params))

    # Path 1: auto tiles -> key axis collapses (tk == N), single-pass kernel.
    z_single = jax.block_until_ready(nonlocal_block(x, params))
    # Path 2: forced multi-step key axis -> flash / online-softmax kernel.
    z_flash = jax.block_until_ready(nonlocal_block(x, params, tq=256, tk=128))

    for name, z in (("single-pass", z_single), ("flash", z_flash)):
        assert z.shape == x.shape
        # bf16 MXU inputs / bf16 exp (f32 accumulation) vs the pure-f32 reference.
        assert jnp.allclose(z, z_ref, atol=3e-2, rtol=3e-2), (
            f"{name} mismatch vs reference, max abs err = "
            f"{float(jnp.max(jnp.abs(z - z_ref)))}")
    print("KERNEL_OK")
</pallas_src>

<mosaic_0001>
module attributes {stable_mosaic.version = 11 : i64} {
  func.func @_qkv_proj_kernel(%arg0: i32, %arg1: i32, %arg2: memref<1x256x512xf32, #tpu.memory_space<vmem>>, %arg3: memref<256x256xbf16, #tpu.memory_space<vmem>>, %arg4: memref<1x256xf32, #tpu.memory_space<vmem>>, %arg5: memref<256x128xbf16, #tpu.memory_space<vmem>>, %arg6: memref<128x1xf32, #tpu.memory_space<vmem>>, %arg7: memref<1x512x256xbf16, #tpu.memory_space<vmem>>, %arg8: memref<1x128x512xbf16, #tpu.memory_space<vmem>>) attributes {dimension_semantics = [#tpu.dimension_semantics<parallel>, #tpu.dimension_semantics<parallel>], iteration_bounds = array<i64: 2, 1>, scalar_prefetch = 0 : i64, scratch_operands = 0 : i64, tpu.core_type = #tpu.core_type<tc>, window_params = [{transform_indices = @transform_0, window_bounds = array<i64: 1, 256, 512>}, {pipeline_mode = #tpu.pipeline_mode<synchronous>, transform_indices = @transform_1, window_bounds = array<i64: 256, 256>}, {pipeline_mode = #tpu.pipeline_mode<synchronous>, transform_indices = @transform_2, window_bounds = array<i64: 1, 256>}, {pipeline_mode = #tpu.pipeline_mode<synchronous>, transform_indices = @transform_3, window_bounds = array<i64: 256, 128>}, {pipeline_mode = #tpu.pipeline_mode<synchronous>, transform_indices = @transform_4, window_bounds = array<i64: 128, 1>}, {transform_indices = @transform_5, window_bounds = array<i64: 1, 512, 256>}, {transform_indices = @transform_6, window_bounds = array<i64: 1, 128, 512>}]} {
    %c0 = arith.constant 0 : index
    %c0_0 = arith.constant 0 : index
    %c0_1 = arith.constant 0 : index
    %0 = vector.load %arg2[%c0, %c0_0, %c0_1] : memref<1x256x512xf32, #tpu.memory_space<vmem>>, vector<1x256x512xf32>
    %1 = vector.shape_cast %0 : vector<1x256x512xf32> to vector<256x512xf32>
    %2 = arith.truncf %1 : vector<256x512xf32> to vector<256x512xbf16>
    %c0_2 = arith.constant 0 : index
    %c0_3 = arith.constant 0 : index
    %3 = vector.load %arg3[%c0_2, %c0_3] : memref<256x256xbf16, #tpu.memory_space<vmem>>, vector<256x256xbf16>
    %cst = arith.constant dense<0.000000e+00> : vector<512x256xf32>
    %4 = tpu.matmul %2, %3, %cst {dimension_numbers = #tpu.dot_dimension_numbers<[0], [0], [1], [1], [0, 1, 1, 1], [], []>} : vector<256x512xbf16>, vector<256x256xbf16>, vector<512x256xf32> -> vector<512x256xf32>
    %c0_4 = arith.constant 0 : index
    %c0_5 = arith.constant 0 : index
    %5 = vector.load %arg4[%c0_4, %c0_5] : memref<1x256xf32, #tpu.memory_space<vmem>>, vector<1x256xf32>
    %6 = vector.broadcast %5 : vector<1x256xf32> to vector<512x256xf32>
    %7 = arith.addf %4, %6 : vector<512x256xf32>
    %8 = arith.truncf %7 : vector<512x256xf32> to vector<512x256xbf16>
    %c0_6 = arith.constant 0 : index
    %c0_7 = arith.constant 0 : index
    %c0_8 = arith.constant 0 : index
    %9 = vector.load %arg7[%c0_6, %c0_7, %c0_8] : memref<1x512x256xbf16, #tpu.memory_space<vmem>>, vector<1x512x256xbf16>
    %10 = vector.shape_cast %9 : vector<1x512x256xbf16> to vector<512x256xbf16>
    %11 = vector.shape_cast %8 : vector<512x256xbf16> to vector<1x512x256xbf16>
    tpu.vector_store %arg7[%c0_6, %c0_7, %c0_8], %11 {strides = array<i32>} : memref<1x512x256xbf16, #tpu.memory_space<vmem>>, vector<1x512x256xbf16>,
    %c0_9 = arith.constant 0 : index
    %c0_10 = arith.constant 0 : index
    %12 = vector.load %arg5[%c0_9, %c0_10] : memref<256x128xbf16, #tpu.memory_space<vmem>>, vector<256x128xbf16>
    %cst_11 = arith.constant dense<0.000000e+00> : vector<128x512xf32>
    %13 = tpu.matmul %12, %2, %cst_11 {dimension_numbers = #tpu.dot_dimension_numbers<[0], [0], [1], [1], [0, 1, 1, 1], [], []>} : vector<256x128xbf16>, vector<256x512xbf16>, vector<128x512xf32> -> vector<128x512xf32>
    %c0_12 = arith.constant 0 : index
    %c0_13 = arith.constant 0 : index
    %14 = vector.load %arg6[%c0_12, %c0_13] : memref<128x1xf32, #tpu.memory_space<vmem>>, vector<128x1xf32>
    %15 = vector.broadcast %14 : vector<128x1xf32> to vector<128x512xf32>
    %16 = arith.addf %13, %15 : vector<128x512xf32>
    %17 = arith.truncf %16 : vector<128x512xf32> to vector<128x512xbf16>
    %c0_14 = arith.constant 0 : index
    %c0_15 = arith.constant 0 : index
    %c0_16 = arith.constant 0 : index
    %18 = vector.load %arg8[%c0_14, %c0_15, %c0_16] : memref<1x128x512xbf16, #tpu.memory_space<vmem>>, vector<1x128x512xbf16>
    %19 = vector.shape_cast %18 : vector<1x128x512xbf16> to vector<128x512xbf16>
    %20 = vector.shape_cast %17 : vector<128x512xbf16> to vector<1x128x512xbf16>
    tpu.vector_store %arg8[%c0_14, %c0_15, %c0_16], %20 {strides = array<i32>} : memref<1x128x512xbf16, #tpu.memory_space<vmem>>, vector<1x128x512xbf16>,
    return
  }
  func.func @transform_0(%arg0: i32, %arg1: i32) -> (i32, i32, i32) {
    %c0_i32 = arith.constant 0 : i32
    %c0_i32_0 = arith.constant 0 : i32
    return %arg0, %c0_i32, %arg1 : i32, i32, i32
  }
  func.func @transform_1(%arg0: i32, %arg1: i32) -> (i32, i32) {
    %c0_i32 = arith.constant 0 : i32
    %c0_i32_0 = arith.constant 0 : i32
    %c0_i32_1 = arith.constant 0 : i32
    return %c0_i32, %c0_i32_0 : i32, i32
  }
  func.func @transform_2(%arg0: i32, %arg1: i32) -> (i32, i32) {
    %c0_i32 = arith.constant 0 : i32
    %c0_i32_0 = arith.constant 0 : i32
    %c0_i32_1 = arith.constant 0 : i32
    return %c0_i32, %c0_i32_0 : i32, i32
  }
  func.func @transform_3(%arg0: i32, %arg1: i32) -> (i32, i32) {
    %c0_i32 = arith.constant 0 : i32
    %c0_i32_0 = arith.constant 0 : i32
    %c0_i32_1 = arith.constant 0 : i32
    return %c0_i32, %c0_i32_0 : i32, i32
  }
  func.func @transform_4(%arg0: i32, %arg1: i32) -> (i32, i32) {
    %c0_i32 = arith.constant 0 : i32
    %c0_i32_0 = arith.constant 0 : i32
    %c0_i32_1 = arith.constant 0 : i32
    return %c0_i32, %c0_i32_0 : i32, i32
  }
  func.func @transform_5(%arg0: i32, %arg1: i32) -> (i32, i32, i32) {
    %c0_i32 = arith.constant 0 : i32
    %c0_i32_0 = arith.constant 0 : i32
    return %arg0, %arg1, %c0_i32 : i32, i32, i32
  }
  func.func @transform_6(%arg0: i32, %arg1: i32) -> (i32, i32, i32) {
    %c0_i32 = arith.constant 0 : i32
    %c0_i32_0 = arith.constant 0 : i32
    return %arg0, %c0_i32, %arg1 : i32, i32, i32
  }
}

</mosaic_0001>

<llo_original>
// kernel: tpu_custom_call.1
$region0: #{tpu_custom_call.1}
  #allocation0 [shape = 'u32[]', space=smem, size = 0x4, offset = 0x4, fixed_abs, tag = 'smem constant byte address 0x4 - core index']
  #allocation1 [shape = 'u32[144,128]{1,0:T(1,128)}', space=vmem, size = 0x12000, scoped, tag = 'internal scratch']
  %s0 = inlined_call_operand.hbm [shape: f32[2,256,512], index: 0, kind: input, shape index: {}]
  %s1 = inlined_call_operand.hbm [shape: bf16[256,256], index: 1, kind: input, shape index: {}]
  %s2 = inlined_call_operand.vmem [shape: f32[1,256], index: 2, kind: input, shape index: {}]
  %s3 = inlined_call_operand.vmem [shape: bf16[256,128], index: 3, kind: input, shape index: {}]
  %s4 = inlined_call_operand.vmem [shape: f32[128,1], index: 4, kind: input, shape index: {}]
  %s5 = inlined_call_operand.hbm [shape: bf16[2,512,256], index: 5, kind: output, shape index: {0}]
  %s6 = inlined_call_operand.hbm [shape: bf16[2,128,512], index: 6, kind: output, shape index: {1}]
  %7 = xla_tuple %s5, %s6
  %s8 = sld [smem:[#allocation0]]
  $region69: #{tpu_custom_call.1} parent=0
    _
  %s10 = ssub.s32 1, %s8
  %s11 = scalar_select 0, %s10, %s8
  $region1: #{tpu_custom_call.1} parent=0
    #allocation2 [shape = 'u8[1048576]{0}', space=vmem, size = 0x100000, scoped, tag = 'input window, operand 0']
    #allocation3 [shape = 's32[2]{0}', space=sflag, size = 0x8, scoped, tag = 'scoped memory for tpu_custom_call.1']
    #allocation4 [shape = 's32[2]{0}', space=sflag, size = 0x8, scoped, tag = 'scoped memory for tpu_custom_call.1']
    #allocation5 [shape = 'u8[131072]{0}', space=vmem, size = 0x20000, scoped, tag = 'input window, operand 1, single buffered']
    #allocation6 [shape = 's32[1]{0}', space=sflag, size = 0x4, scoped, tag = 'scoped memory for tpu_custom_call.1']
    #allocation7 [shape = 'u8[524288]{0}', space=vmem, size = 0x80000, scoped, tag = 'output window, operand 0']
    #allocation8 [shape = 'u8[262144]{0}', space=vmem, size = 0x40000, scoped, tag = 'output window, operand 1']
    #allocation9 [shape = 's32[2]{0}', space=sflag, size = 0x8, scoped, tag = 'scoped memory for tpu_custom_call.1']
    %12 = vsyncpa [#allocation3], 0
    %s13 = scalar_lea.sflag [#allocation3], 1
    %14 = vsyncpa %s13, 0
    %15 = vsyncpa [#allocation6], 0
    %16 = vsyncpa [#allocation4], 0
    %s17 = scalar_lea.sflag [#allocation4], 1
    %18 = vsyncpa %s17, 0
    %19 = vsyncpa [#allocation9], 0
    %s20 = scalar_lea.sflag [#allocation9], 1
    %21 = vsyncpa %s20, 0
    loop: start=0, step=1, limit=4
    $region2: #{tpu_custom_call.1} parent=1 // loop_pre_header
      _
    $region3: #{tpu_custom_call.1} parent=1 // loop_header
      %s23 = sphi 0, %s27
      %p24 = scmp.ge.s32.totalorder %s23, 4
      %s30 = sphi 0, %s42
      %s31 = sphi 0, %s38
      %s32 = sphi 0, %s30
      %s33 = sphi 0, %s31
      %s34 = sphi 0, %s32
      %s35 = sphi 0, %s33
      %s47 = sphi 0, %s49
      %s50 = sphi 0, %s47
      %s51 = sphi 0, %s50
      %s67 = sphi 0, %s51
      %s71 = sphi 0, %s71
      %s73 = sphi 0, %s71
      %s74 = sphi 0, %s73
      %s88 = sphi 0, %s74
      %s92 = sphi 0, %s92
      %s94 = sphi 0, %s92
      %s95 = sphi 0, %s94
      %s109 = sphi 0, %s95
      %s113 = sphi 0, %s113
      %s115 = sphi 0, %s113
      %s116 = sphi 0, %s115
      %s130 = sphi 0, %s116
      %s134 = sphi 0, %s134
      %s136 = sphi 0, %s134
      %s137 = sphi 0, %s136
      %s151 = sphi 0, %s137
      %s159 = sphi 0, %s161
      %s162 = sphi 0, %s159
      %s163 = sphi 0, %s162
      %s179 = sphi 0, %s163
      %s187 = sphi 0, %s189
      %s190 = sphi 0, %s187
      %s191 = sphi 0, %s190
      %s207 = sphi 0, %s191
    $region4: #{tpu_custom_call.1} parent=1 // loop_header_branch
      %26 = sbr.rel (%p24) target = $region8
    $region5: #{tpu_custom_call.1} parent=1 // loop_body
      %s28 = ssub.s32 %s23, 1
      %s29 = ssub.s32 %s23, 2
      %s36 = sadd.s32 1, %s31
      %p37 = scmp.ge.s32.totalorder %s36, 1
      %s38 = scalar_select %p37, 0, %s36
      %s39 = sadd.s32 1, %s30
      %s40 = scalar_select %p37, %s39, %s30
      %p41 = scmp.ge.s32.totalorder %s40, 2
      %s42 = scalar_select %p41, 0, %s40
      %s43 = ssub.s32 %s30, %s42
      %s44 = ssub.s32 %s31, %s38
      %s45 = sor.u32 %s43, %s44
      %p46 = scmp.eq.s32.totalorder %s45, 0
      %s48 = sadd.s32 %s47, 1
      %s49 = scalar_select %p46, %s47, %s48
      %p52 = pneg %p46
      %p53 = scmp.eq.s32.totalorder %s23, 1
      %p54 = por %p52, %p53
      %p55 = scmp.ne.s32.totalorder %s47, %s50
      %p56 = scmp.eq.s32.totalorder %s23, 0
      %p57 = por %p55, %p56
      %p58 = scmp.ne.s32.totalorder %s47, %s50
      %p59 = scmp.eq.s32.totalorder %s28, 1
      %p60 = por %p58, %p59
      %p61 = scmp.ne.s32.totalorder %s50, %s51
      %p62 = scmp.eq.s32.totalorder %s28, 0
      %p63 = por %p61, %p62
      %p64 = scmp.ne.s32.totalorder %s50, %s51
      %p65 = scmp.eq.s32.totalorder %s29, 1
      %p66 = por %p64, %p65
      %p68 = scmp.ne.s32.totalorder %s51, %s67
      %p69 = scmp.eq.s32.totalorder %s29, 0
      %p70 = por %p68, %p69
      %s72 = sadd.s32 %s71, 1
      %p75 = scmp.eq.s32.totalorder %s23, 1
      %p76 = scmp.ne.s32.totalorder %s71, %s73
      %p77 = scmp.eq.s32.totalorder %s23, 0
      %p78 = por %p76, %p77
      %p79 = scmp.ne.s32.totalorder %s71, %s73
      %p80 = scmp.eq.s32.totalorder %s28, 1
      %p81 = por %p79, %p80
      %p82 = scmp.ne.s32.totalorder %s73, %s74
      %p83 = scmp.eq.s32.totalorder %s28, 0
      %p84 = por %p82, %p83
      %p85 = scmp.ne.s32.totalorder %s73, %s74
      %p86 = scmp.eq.s32.totalorder %s29, 1
      %p87 = por %p85, %p86
      %p89 = scmp.ne.s32.totalorder %s74, %s88
      %p90 = scmp.eq.s32.totalorder %s29, 0
      %p91 = por %p89, %p90
      %s93 = sadd.s32 %s92, 1
      %p96 = scmp.eq.s32.totalorder %s23, 1
      %p97 = scmp.ne.s32.totalorder %s92, %s94
      %p98 = scmp.eq.s32.totalorder %s23, 0
      %p99 = por %p97, %p98
      %p100 = scmp.ne.s32.totalorder %s92, %s94
      %p101 = scmp.eq.s32.totalorder %s28, 1
      %p102 = por %p100, %p101
      %p103 = scmp.ne.s32.totalorder %s94, %s95
      %p104 = scmp.eq.s32.totalorder %s28, 0
      %p105 = por %p103, %p104
      %p106 = scmp.ne.s32.totalorder %s94, %s95
      %p107 = scmp.eq.s32.totalorder %s29, 1
      %p108 = por %p106, %p107
      %p110 = scmp.ne.s32.totalorder %s95, %s109
      %p111 = scmp.eq.s32.totalorder %s29, 0
      %p112 = por %p110, %p111
      %s114 = sadd.s32 %s113, 1
      %p117 = scmp.eq.s32.totalorder %s23, 1
      %p118 = scmp.ne.s32.totalorder %s113, %s115
      %p119 = scmp.eq.s32.totalorder %s23, 0
      %p120 = por %p118, %p119
      %p121 = scmp.ne.s32.totalorder %s113, %s115
      %p122 = scmp.eq.s32.totalorder %s28, 1
      %p123 = por %p121, %p122
      %p124 = scmp.ne.s32.totalorder %s115, %s116
      %p125 = scmp.eq.s32.totalorder %s28, 0
      %p126 = por %p124, %p125
      %p127 = scmp.ne.s32.totalorder %s115, %s116
      %p128 = scmp.eq.s32.totalorder %s29, 1
      %p129 = por %p127, %p128
      %p131 = scmp.ne.s32.totalorder %s116, %s130
      %p132 = scmp.eq.s32.totalorder %s29, 0
      %p133 = por %p131, %p132
      %s135 = sadd.s32 %s134, 1
      %p138 = scmp.eq.s32.totalorder %s23, 1
      %p139 = scmp.ne.s32.totalorder %s134, %s136
      %p140 = scmp.eq.s32.totalorder %s23, 0
      %p141 = por %p139, %p140
      %p142 = scmp.ne.s32.totalorder %s134, %s136
      %p143 = scmp.eq.s32.totalorder %s28, 1
      %p144 = por %p142, %p143
      %p145 = scmp.ne.s32.totalorder %s136, %s137
      %p146 = scmp.eq.s32.totalorder %s28, 0
      %p147 = por %p145, %p146
      %p148 = scmp.ne.s32.totalorder %s136, %s137
      %p149 = scmp.eq.s32.totalorder %s29, 1
      %p150 = por %p148, %p149
      %p152 = scmp.ne.s32.totalorder %s137, %s151
      %p153 = scmp.eq.s32.totalorder %s29, 0
      %p154 = por %p152, %p153
      %s155 = ssub.s32 %s30, %s42
      %s156 = ssub.s32 %s31, %s38
      %s157 = sor.u32 %s155, %s156
      %p158 = scmp.eq.s32.totalorder %s157, 0
      %s160 = sadd.s32 %s159, 1
      %s161 = scalar_select %p158, %s159, %s160
      %p164 = pneg %p158
      %p165 = scmp.eq.s32.totalorder %s23, 1
      %p166 = por %p164, %p165
      %p167 = scmp.ne.s32.totalorder %s159, %s162
      %p168 = scmp.eq.s32.totalorder %s23, 0
      %p169 = por %p167, %p168
      %p170 = scmp.ne.s32.totalorder %s159, %s162
      %p171 = scmp.eq.s32.totalorder %s28, 1
      %p172 = por %p170, %p171
      %p173 = scmp.ne.s32.totalorder %s162, %s163
      %p174 = scmp.eq.s32.totalorder %s28, 0
      %p175 = por %p173, %p174
      %p176 = scmp.ne.s32.totalorder %s162, %s163
      %p177 = scmp.eq.s32.totalorder %s29, 1
      %p178 = por %p176, %p177
      %p180 = scmp.ne.s32.totalorder %s163, %s179
      %p181 = scmp.eq.s32.totalorder %s29, 0
      %p182 = por %p180, %p181
      %s183 = ssub.s32 %s30, %s42
      %s184 = ssub.s32 %s31, %s38
      %s185 = sor.u32 %s183, %s184
      %p186 = scmp.eq.s32.totalorder %s185, 0
      %s188 = sadd.s32 %s187, 1
      %s189 = scalar_select %p186, %s187, %s188
      %p192 = pneg %p186
      %p193 = scmp.eq.s32.totalorder %s23, 1
      %p194 = por %p192, %p193
      %p195 = scmp.ne.s32.totalorder %s187, %s190
      %p196 = scmp.eq.s32.totalorder %s23, 0
      %p197 = por %p195, %p196
      %p198 = scmp.ne.s32.totalorder %s187, %s190
      %p199 = scmp.eq.s32.totalorder %s28, 1
      %p200 = por %p198, %p199
      %p201 = scmp.ne.s32.totalorder %s190, %s191
      %p202 = scmp.eq.s32.totalorder %s28, 0
      %p203 = por %p201, %p202
      %p204 = scmp.ne.s32.totalorder %s190, %s191
      %p205 = scmp.eq.s32.totalorder %s29, 1
      %p206 = por %p204, %p205
      %p208 = scmp.ne.s32.totalorder %s191, %s207
      %p209 = scmp.eq.s32.totalorder %s29, 0
      %p210 = por %p208, %p209
      %p211 = scmp.le.s32.totalorder 1, %s23
      %p212 = scmp.lt.s32.totalorder %s23, 3
      %p213 = pnand %p211, %p212
      %p214 = pneg %p213
      // Predicated region
      $region9: #{tpu_custom_call.1} parent=5 // pred_check
        _
      $region10: #{tpu_custom_call.1} parent=5 // pred_check_branch
        %216 = sbr.rel (%p213) target = $region12
      $region11: #{tpu_custom_call.1} parent=5 // pred_region
        %s217 = ssub.s32 %s23, 1
        // Predicated region
        $region13: #{tpu_custom_call.1} parent=11 // pred_check
          %p218 = pneg %p84
        $region14: #{tpu_custom_call.1} parent=11 // pred_check_branch
          %220 = sbr.rel (%p218) target = $region16
        $region15: #{tpu_custom_call.1} parent=11 // pred_region
          %s222 = ssub.s32 4096, 4096
          %223 = vsyncadd [#allocation6], %s222
          %s224 = sshll.u32 [#allocation5], 4
          %s225 = int_to_ptr.vmem [resolvable:$true] %s224
          %230 = dma.hbm_to_vmem [thread:$0]  %s1, 4096, %s225, [#allocation6], 128, 128, 8
        $region16: #{tpu_custom_call.1} parent=11 // pred_fallthru
          _
        // Predicated region
        $region17: #{tpu_custom_call.1} parent=11 // pred_check
          %p231 = pneg %p105
        $region18: #{tpu_custom_call.1} parent=11 // pred_check_branch
          %233 = sbr.rel (%p231) target = $region20
        $region19: #{tpu_custom_call.1} parent=11 // pred_region
          _
        $region20: #{tpu_custom_call.1} parent=11 // pred_fallthru
          _
        // Predicated region
        $region21: #{tpu_custom_call.1} parent=11 // pred_check
          %p234 = pneg %p126
        $region22: #{tpu_custom_call.1} parent=11 // pred_check_branch
          %236 = sbr.rel (%p234) target = $region24
        $region23: #{tpu_custom_call.1} parent=11 // pred_region
          _
        $region24: #{tpu_custom_call.1} parent=11 // pred_fallthru
          _
        // Predicated region
        $region25: #{tpu_custom_call.1} parent=11 // pred_check
          %p237 = pneg %p147
        $region26: #{tpu_custom_call.1} parent=11 // pred_check_branch
          %239 = sbr.rel (%p237) target = $region28
        $region27: #{tpu_custom_call.1} parent=11 // pred_region
          _
        $region28: #{tpu_custom_call.1} parent=11 // pred_fallthru
          _
      $region12: #{tpu_custom_call.1} parent=5 // pred_fallthru
        _
      %p240 = scmp.lt.s32.totalorder %s23, 2
      // Predicated region
      $region29: #{tpu_custom_call.1} parent=5 // pred_check
        %p241 = pneg %p240
      $region30: #{tpu_custom_call.1} parent=5 // pred_check_branch
        %243 = sbr.rel (%p241) target = $region32
      $region31: #{tpu_custom_call.1} parent=5 // pred_region
        // Predicated region
        $region33: #{tpu_custom_call.1} parent=31 // pred_check
          %p244 = pneg %p57
        $region34: #{tpu_custom_call.1} parent=31 // pred_check_branch
          %246 = sbr.rel (%p244) target = $region36
        $region35: #{tpu_custom_call.1} parent=31 // pred_region
          %s247 = sand.u32 %s47, 1
          %s248 = scalar_lea.sflag [#allocation3], %s247
          %s249 = sand.u32 %s47, 1
          %s250 = smul.addr %s249, 1024
          %s251 = scalar_lea.vmem [#allocation2], %s250
          %s252 = smul.u32 4, %s31
          %s254 = ssub.s32 16384, 16384
          %255 = vsyncadd %s248, %s254
          %s256 = smul.addr %s30, 128
          %s257 = sadd.s32 %s252, %s256
          %s258 = smul.addr %s257, 128
          %s259 = scalar_lea.hbm %s0, %s258
          %s260 = sshll.u32 %s251, 4
          %s261 = int_to_ptr.vmem [resolvable:$true] %s260
          %266 = dma.hbm_to_vmem [thread:$0]  %s259, 16384, %s261, %s248, 512, 512, 32
        $region36: #{tpu_custom_call.1} parent=31 // pred_fallthru
          _
      $region32: #{tpu_custom_call.1} parent=5 // pred_fallthru
        _
      %p267 = scmp.le.s32.totalorder 1, %s23
      %p268 = scmp.lt.s32.totalorder %s23, 3
      %p269 = pnand %p267, %p268
      %p270 = pneg %p269
      // Predicated region
      $region37: #{tpu_custom_call.1} parent=5 // pred_check
        _
      $region38: #{tpu_custom_call.1} parent=5 // pred_check_branch
        %272 = sbr.rel (%p269) target = $region40
      $region39: #{tpu_custom_call.1} parent=5 // pred_region
        %s273 = ssub.s32 %s23, 1
        %s274 = sand.u32 %s50, 1
        %s275 = scalar_lea.sflag [#allocation3], %s274
        %s276 = sand.u32 %s50, 1
        %s277 = smul.addr %s276, 1024
        %s278 = scalar_lea.vmem [#allocation2], %s277
        // Predicated region
        $region41: #{tpu_custom_call.1} parent=39 // pred_check
          %p279 = pneg %p63
        $region42: #{tpu_custom_call.1} parent=39 // pred_check_branch
          %281 = sbr.rel (%p279) target = $region44
        $region43: #{tpu_custom_call.1} parent=39 // pred_region
          %282 = dma.done %s275, 16384
        $region44: #{tpu_custom_call.1} parent=39 // pred_fallthru
          _
        // Predicated region
        $region45: #{tpu_custom_call.1} parent=39 // pred_check
          %p283 = pneg %p84
        $region46: #{tpu_custom_call.1} parent=39 // pred_check_branch
          %285 = sbr.rel (%p283) target = $region48
        $region47: #{tpu_custom_call.1} parent=39 // pred_region
          %286 = dma.done [#allocation6], 4096
        $region48: #{tpu_custom_call.1} parent=39 // pred_fallthru
          _
        %s287 = sand.u32 %s50, 1
        %s288 = scalar_lea.sflag [#allocation3], %s287
        %s289 = sand.u32 %s50, 1
        %s290 = smul.addr %s289, 1024
        %s291 = scalar_lea.vmem [#allocation2], %s290
        %p292 = pneg %p63
        %p293 = pneg %p60
        %p294 = pneg %p84
        %p295 = pneg %p81
        %p296 = pneg %p105
        %p297 = pneg %p102
        %p298 = pneg %p126
        %p299 = pneg %p123
        %p300 = pneg %p147
        %p301 = pneg %p144
        %p302 = pneg %p175
        %p303 = pneg %p172
        %s304 = sand.u32 %s162, 1
        %s305 = scalar_lea.sflag [#allocation4], %s304
        %s306 = sand.u32 %s162, 1
        %s307 = smul.addr %s306, 512
        %s308 = scalar_lea.vmem [#allocation7], %s307
        %p309 = pneg %p203
        %p310 = pneg %p200
        %s311 = sand.u32 %s190, 1
        %s312 = scalar_lea.sflag [#allocation9], %s311
        %s313 = sand.u32 %s190, 1
        %s314 = smul.addr %s313, 256
        %s315 = scalar_lea.vmem [#allocation8], %s314
        %s316 = smul.u32 4, %s33
        %s317 = smul.u32 64, %s33
        %s318 = smul.u32 4, %s33
        %v319 = vld [vmem:[%s278] sm:$0xff]
        %v320 = vld [vmem:[%s278 + $0x8] sm:$0xff]
        %v321 = vld [vmem:[%s278 + $0x10] sm:$0xff]
        %v322 = vld [vmem:[%s278 + $0x18] sm:$0xff]
        %v323 = vld [vmem:[%s278 + $0x20] sm:$0xff]
        %v324 = vld [vmem:[%s278 + $0x28] sm:$0xff]
        %v325 = vld [vmem:[%s278 + $0x30] sm:$0xff]
        %v326 = vld [vmem:[%s278 + $0x38] sm:$0xff]
        %v327 = vld [vmem:[%s278 + $0x40] sm:$0xff]
        %v328 = vld [vmem:[%s278 + $0x48] sm:$0xff]
        %v329 = vld [vmem:[%s278 + $0x50] sm:$0xff]
        %v330 = vld [vmem:[%s278 + $0x58] sm:$0xff]
        %v331 = vld [vmem:[%s278 + $0x60] sm:$0xff]
        %v332 = vld [vmem:[%s278 + $0x68] sm:$0xff]
        %v333 = vld [vmem:[%s278 + $0x70] sm:$0xff]
        %v334 = vld [vmem:[%s278 + $0x78] sm:$0xff]
        %v335 = vld [vmem:[%s278 + $0x80] sm:$0xff]
        %v336 = vld [vmem:[%s278 + $0x88] sm:$0xff]
        %v337 = vld [vmem:[%s278 + $0x90] sm:$0xff]
        %v338 = vld [vmem:[%s278 + $0x98] sm:$0xff]
        %v339 = vld [vmem:[%s278 + $0xa0] sm:$0xff]
        %v340 = vld [vmem:[%s278 + $0xa8] sm:$0xff]
        %v341 = vld [vmem:[%s278 + $0xb0] sm:$0xff]
        %v342 = vld [vmem:[%s278 + $0xb8] sm:$0xff]
        %v343 = vld [vmem:[%s278 + $0xc0] sm:$0xff]
        %v344 = vld [vmem:[%s278 + $0xc8] sm:$0xff]
        %v345 = vld [vmem:[%s278 + $0xd0] sm:$0xff]
        %v346 = vld [vmem:[%s278 + $0xd8] sm:$0xff]
        %v347 = vld [vmem:[%s278 + $0xe0] sm:$0xff]
        %v348 = vld [vmem:[%s278 + $0xe8] sm:$0xff]
        %v349 = vld [vmem:[%s278 + $0xf0] sm:$0xff]
        %v350 = vld [vmem:[%s278 + $0xf8] sm:$0xff]
        %v351 = vld [vmem:[%s278 + $0x100] sm:$0xff]
        %v352 = vld [vmem:[%s278 + $0x108] sm:$0xff]
        %v353 = vld [vmem:[%s278 + $0x110] sm:$0xff]
        %v354 = vld [vmem:[%s278 + $0x118] sm:$0xff]
        %v355 = vld [vmem:[%s278 + $0x120] sm:$0xff]
        %v356 = vld [vmem:[%s278 + $0x128] sm:$0xff]
        %v357 = vld [vmem:[%s278 + $0x130] sm:$0xff]
        %v358 = vld [vmem:[%s278 + $0x138] sm:$0xff]
        %v359 = vld [vmem:[%s278 + $0x140] sm:$0xff]
        %v360 = vld [vmem:[%s278 + $0x148] sm:$0xff]
        %v361 = vld [vmem:[%s278 + $0x150] sm:$0xff]
        %v362 = vld [vmem:[%s278 + $0x158] sm:$0xff]
        %v363 = vld [vmem:[%s278 + $0x160] sm:$0xff]
        %v364 = vld [vmem:[%s278 + $0x168] sm:$0xff]
        %v365 = vld [vmem:[%s278 + $0x170] sm:$0xff]
        %v366 = vld [vmem:[%s278 + $0x178] sm:$0xff]
        %v367 = vld [vmem:[%s278 + $0x180] sm:$0xff]
        %v368 = vld [vmem:[%s278 + $0x188] sm:$0xff]
        %v369 = vld [vmem:[%s278 + $0x190] sm:$0xff]
        %v370 = vld [vmem:[%s278 + $0x198] sm:$0xff]
        %v371 = vld [vmem:[%s278 + $0x1a0] sm:$0xff]
        %v372 = vld [vmem:[%s278 + $0x1a8] sm:$0xff]
        %v373 = vld [vmem:[%s278 + $0x1b0] sm:$0xff]
        %v374 = vld [vmem:[%s278 + $0x1b8] sm:$0xff]
        %v375 = vld [vmem:[%s278 + $0x1c0] sm:$0xff]
        %v376 = vld [vmem:[%s278 + $0x1c8] sm:$0xff]
        %v377 = vld [vmem:[%s278 + $0x1d0] sm:$0xff]
        %v378 = vld [vmem:[%s278 + $0x1d8] sm:$0xff]
        %v379 = vld [vmem:[%s278 + $0x1e0] sm:$0xff]
        %v380 = vld [vmem:[%s278 + $0x1e8] sm:$0xff]
        %v381 = vld [vmem:[%s278 + $0x1f0] sm:$0xff]
        %v382 = vld [vmem:[%s278 + $0x1f8] sm:$0xff]
        %v383 = vld [vmem:[%s278 + $0x200] sm:$0xff]
        %v384 = vld [vmem:[%s278 + $0x208] sm:$0xff]
        %v385 = vld [vmem:[%s278 + $0x210] sm:$0xff]
        %v386 = vld [vmem:[%s278 + $0x218] sm:$0xff]
        %v387 = vld [vmem:[%s278 + $0x220] sm:$0xff]
        %v388 = vld [vmem:[%s278 + $0x228] sm:$0xff]
        %v389 = vld [vmem:[%s278 + $0x230] sm:$0xff]
        %v390 = vld [vmem:[%s278 + $0x238] sm:$0xff]
        %v391 = vld [vmem:[%s278 + $0x240] sm:$0xff]
        %v392 = vld [vmem:[%s278 + $0x248] sm:$0xff]
        %v393 = vld [vmem:[%s278 + $0x250] sm:$0xff]
        %v394 = vld [vmem:[%s278 + $0x258] sm:$0xff]
        %v395 = vld [vmem:[%s278 + $0x260] sm:$0xff]
        %v396 = vld [vmem:[%s278 + $0x268] sm:$0xff]
        %v397 = vld [vmem:[%s278 + $0x270] sm:$0xff]
        %v398 = vld [vmem:[%s278 + $0x278] sm:$0xff]
        %v399 = vld [vmem:[%s278 + $0x280] sm:$0xff]
        %v400 = vld [vmem:[%s278 + $0x288] sm:$0xff]
        %v401 = vld [vmem:[%s278 + $0x290] sm:$0xff]
        %v402 = vld [vmem:[%s278 + $0x298] sm:$0xff]
        %v403 = vld [vmem:[%s278 + $0x2a0] sm:$0xff]
        %v404 = vld [vmem:[%s278 + $0x2a8] sm:$0xff]
        %v405 = vld [vmem:[%s278 + $0x2b0] sm:$0xff]
        %v406 = vld [vmem:[%s278 + $0x2b8] sm:$0xff]
        %v407 = vld [vmem:[%s278 + $0x2c0] sm:$0xff]
        %v408 = vld [vmem:[%s278 + $0x2c8] sm:$0xff]
        %v409 = vld [vmem:[%s278 + $0x2d0] sm:$0xff]
        %v410 = vld [vmem:[%s278 + $0x2d8] sm:$0xff]
        %v411 = vld [vmem:[%s278 + $0x2e0] sm:$0xff]
        %v412 = vld [vmem:[%s278 + $0x2e8] sm:$0xff]
        %v413 = vld [vmem:[%s278 + $0x2f0] sm:$0xff]
        %v414 = vld [vmem:[%s278 + $0x2f8] sm:$0xff]
        %v415 = vld [vmem:[%s278 + $0x300] sm:$0xff]
        %v416 = vld [vmem:[%s278 + $0x308] sm:$0xff]
        %v417 = vld [vmem:[%s278 + $0x310] sm:$0xff]
        %v418 = vld [vmem:[%s278 + $0x318] sm:$0xff]
        %v419 = vld [vmem:[%s278 + $0x320] sm:$0xff]
        %v420 = vld [vmem:[%s278 + $0x328] sm:$0xff]
        %v421 = vld [vmem:[%s278 + $0x330] sm:$0xff]
        %v422 = vld [vmem:[%s278 + $0x338] sm:$0xff]
        %v423 = vld [vmem:[%s278 + $0x340] sm:$0xff]
        %v424 = vld [vmem:[%s278 + $0x348] sm:$0xff]
        %v425 = vld [vmem:[%s278 + $0x350] sm:$0xff]
        %v426 = vld [vmem:[%s278 + $0x358] sm:$0xff]
        %v427 = vld [vmem:[%s278 + $0x360] sm:$0xff]
        %v428 = vld [vmem:[%s278 + $0x368] sm:$0xff]
        %v429 = vld [vmem:[%s278 + $0x370] sm:$0xff]
        %v430 = vld [vmem:[%s278 + $0x378] sm:$0xff]
        %v431 = vld [vmem:[%s278 + $0x380] sm:$0xff]
        %v432 = vld [vmem:[%s278 + $0x388] sm:$0xff]
        %v433 = vld [vmem:[%s278 + $0x390] sm:$0xff]
        %v434 = vld [vmem:[%s278 + $0x398] sm:$0xff]
        %v435 = vld [vmem:[%s278 + $0x3a0] sm:$0xff]
        %v436 = vld [vmem:[%s278 + $0x3a8] sm:$0xff]
        %v437 = vld [vmem:[%s278 + $0x3b0] sm:$0xff]
        %v438 = vld [vmem:[%s278 + $0x3b8] sm:$0xff]
        %v439 = vld [vmem:[%s278 + $0x3c0] sm:$0xff]
        %v440 = vld [vmem:[%s278 + $0x3c8] sm:$0xff]
        %v441 = vld [vmem:[%s278 + $0x3d0] sm:$0xff]
        %v442 = vld [vmem:[%s278 + $0x3d8] sm:$0xff]
        %v443 = vld [vmem:[%s278 + $0x3e0] sm:$0xff]
        %v444 = vld [vmem:[%s278 + $0x3e8] sm:$0xff]
        %v445 = vld [vmem:[%s278 + $0x3f0] sm:$0xff]
        %v446 = vld [vmem:[%s278 + $0x3f8] sm:$0xff]
        %v447 = vpack.c.bf16 %v323, %v319
        %v448 = vpack.c.bf16 %v324, %v320
        %v449 = vpack.c.bf16 %v325, %v321
        %v450 = vpack.c.bf16 %v326, %v322
        %v451 = vpack.c.bf16 %v331, %v327
        %v452 = vpack.c.bf16 %v332, %v328
        %v453 = vpack.c.bf16 %v333, %v329
        %v454 = vpack.c.bf16 %v334, %v330
        %v455 = vpack.c.bf16 %v339, %v335
        %v456 = vpack.c.bf16 %v340, %v336
        %v457 = vpack.c.bf16 %v341, %v337
        %v458 = vpack.c.bf16 %v342, %v338
        %v459 = vpack.c.bf16 %v347, %v343
        %v460 = vpack.c.bf16 %v348, %v344
        %v461 = vpack.c.bf16 %v349, %v345
        %v462 = vpack.c.bf16 %v350, %v346
        %v463 = vpack.c.bf16 %v355, %v351
        %v464 = vpack.c.bf16 %v356, %v352
        %v465 = vpack.c.bf16 %v357, %v353
        %v466 = vpack.c.bf16 %v358, %v354
        %v467 = vpack.c.bf16 %v363, %v359
        %v468 = vpack.c.bf16 %v364, %v360
        %v469 = vpack.c.bf16 %v365, %v361
        %v470 = vpack.c.bf16 %v366, %v362
        %v471 = vpack.c.bf16 %v371, %v367
        %v472 = vpack.c.bf16 %v372, %v368
        %v473 = vpack.c.bf16 %v373, %v369
        %v474 = vpack.c.bf16 %v374, %v370
        %v475 = vpack.c.bf16 %v379, %v375
        %v476 = vpack.c.bf16 %v380, %v376
        %v477 = vpack.c.bf16 %v381, %v377
        %v478 = vpack.c.bf16 %v382, %v378
        %v479 = vpack.c.bf16 %v387, %v383
        %v480 = vpack.c.bf16 %v388, %v384
        %v481 = vpack.c.bf16 %v389, %v385
        %v482 = vpack.c.bf16 %v390, %v386
        %v483 = vpack.c.bf16 %v395, %v391
        %v484 = vpack.c.bf16 %v396, %v392
        %v485 = vpack.c.bf16 %v397, %v393
        %v486 = vpack.c.bf16 %v398, %v394
        %v487 = vpack.c.bf16 %v403, %v399
        %v488 = vpack.c.bf16 %v404, %v400
        %v489 = vpack.c.bf16 %v405, %v401
        %v490 = vpack.c.bf16 %v406, %v402
        %v491 = vpack.c.bf16 %v411, %v407
        %v492 = vpack.c.bf16 %v412, %v408
        %v493 = vpack.c.bf16 %v413, %v409
        %v494 = vpack.c.bf16 %v414, %v410
        %v495 = vpack.c.bf16 %v419, %v415
        %v496 = vpack.c.bf16 %v420, %v416
        %v497 = vpack.c.bf16 %v421, %v417
        %v498 = vpack.c.bf16 %v422, %v418
        %v499 = vpack.c.bf16 %v427, %v423
        %v500 = vpack.c.bf16 %v428, %v424
        %v501 = vpack.c.bf16 %v429, %v425
        %v502 = vpack.c.bf16 %v430, %v426
        %v503 = vpack.c.bf16 %v435, %v431
        %v504 = vpack.c.bf16 %v436, %v432
        %v505 = vpack.c.bf16 %v437, %v433
        %v506 = vpack.c.bf16 %v438, %v434
        %v507 = vpack.c.bf16 %v443, %v439
        %v508 = vpack.c.bf16 %v444, %v440
        %v509 = vpack.c.bf16 %v445, %v441
        %v510 = vpack.c.bf16 %v446, %v442
        %v511 = vld [vmem:[#allocation5] sm:$0xff]
        %v512 = vld [vmem:[#allocation5 + $0x8] sm:$0xff]
        %v513 = vld [vmem:[#allocation5 + $0x10] sm:$0xff]
        %v514 = vld [vmem:[#allocation5 + $0x18] sm:$0xff]
        %v515 = vld [vmem:[#allocation5 + $0x20] sm:$0xff]
        %v516 = vld [vmem:[#allocation5 + $0x28] sm:$0xff]
        %v517 = vld [vmem:[#allocation5 + $0x30] sm:$0xff]
        %v518 = vld [vmem:[#allocation5 + $0x38] sm:$0xff]
        %v519 = vld [vmem:[#allocation5 + $0x40] sm:$0xff]
        %v520 = vld [vmem:[#allocation5 + $0x48] sm:$0xff]
        %v521 = vld [vmem:[#allocation5 + $0x50] sm:$0xff]
        %v522 = vld [vmem:[#allocation5 + $0x58] sm:$0xff]
        %v523 = vld [vmem:[#allocation5 + $0x60] sm:$0xff]
        %v524 = vld [vmem:[#allocation5 + $0x68] sm:$0xff]
        %v525 = vld [vmem:[#allocation5 + $0x70] sm:$0xff]
        %v526 = vld [vmem:[#allocation5 + $0x78] sm:$0xff]
        %v527 = vld [vmem:[#allocation5 + $0x80] sm:$0xff]
        %v528 = vld [vmem:[#allocation5 + $0x88] sm:$0xff]
        %v529 = vld [vmem:[#allocation5 + $0x90] sm:$0xff]
        %v530 = vld [vmem:[#allocation5 + $0x98] sm:$0xff]
        %v531 = vld [vmem:[#allocation5 + $0xa0] sm:$0xff]
        %v532 = vld [vmem:[#allocation5 + $0xa8] sm:$0xff]
        %v533 = vld [vmem:[#allocation5 + $0xb0] sm:$0xff]
        %v534 = vld [vmem:[#allocation5 + $0xb8] sm:$0xff]
        %v535 = vld [vmem:[#allocation5 + $0xc0] sm:$0xff]
        %v536 = vld [vmem:[#allocation5 + $0xc8] sm:$0xff]
        %v537 = vld [vmem:[#allocation5 + $0xd0] sm:$0xff]
        %v538 = vld [vmem:[#allocation5 + $0xd8] sm:$0xff]
        %v539 = vld [vmem:[#allocation5 + $0xe0] sm:$0xff]
        %v540 = vld [vmem:[#allocation5 + $0xe8] sm:$0xff]
        %v541 = vld [vmem:[#allocation5 + $0xf0] sm:$0xff]
        %v542 = vld [vmem:[#allocation5 + $0xf8] sm:$0xff]
        %v543 = vld [vmem:[%s2] sm:$0x3]
        %v545 = vlaneseq
        %v546 = vshrl.u32 %v545, 7
        %v547 = vsub.s32 0, %v546
        %v548 = vrot.slane %v543, %v547
        %v549 = vlaneseq
        %v550 = vshrl.u32 %v549, 7
        %v551 = vsub.s32 1, %v550
        %v552 = vrot.slane %v543, %v551
        %555 = vxpose.xlu0.c.b16.start [1/8] %v447, 128
        %556 = vxpose.xlu0.c.b16.cont [2/8] %v451, 128
        %557 = vxpose.xlu0.c.b16.cont [3/8] %v455, 128
        %558 = vxpose.xlu0.c.b16.cont [4/8] %v459, 128
        %559 = vxpose.xlu0.c.b16.cont [5/8] %v463, 128
        %560 = vxpose.xlu0.c.b16.cont [6/8] %v467, 128
        %561 = vxpose.xlu0.c.b16.cont [7/8] %v471, 128
        %562 = vxpose.xlu0.c.b16.end [8/8] %v475, 128
        %v563 = vpop.trf.xlu0
        %v564 = vpop.trf.xlu0
        %v565 = vpop.trf.xlu0
        %v566 = vpop.trf.xlu0
        %v567 = vpop.trf.xlu0
        %v568 = vpop.trf.xlu0
        %v569 = vpop.trf.xlu0
        %v570 = vpop.trf.xlu0
        %571 = vxpose.xlu0.c.b16.start [1/8] %v448, 128
        %572 = vxpose.xlu0.c.b16.cont [2/8] %v452, 128
        %573 = vxpose.xlu0.c.b16.cont [3/8] %v456, 128
        %574 = vxpose.xlu0.c.b16.cont [4/8] %v460, 128
        %575 = vxpose.xlu0.c.b16.cont [5/8] %v464, 128
        %576 = vxpose.xlu0.c.b16.cont [6/8] %v468, 128
        %577 = vxpose.xlu0.c.b16.cont [7/8] %v472, 128
        %578 = vxpose.xlu0.c.b16.end [8/8] %v476, 128
        %v579 = vpop.trf.xlu0
        %v580 = vpop.trf.xlu0
        %v581 = vpop.trf.xlu0
        %v582 = vpop.trf.xlu0
        %v583 = vpop.trf.xlu0
        %v584 = vpop.trf.xlu0
        %v585 = vpop.trf.xlu0
        %v586 = vpop.trf.xlu0
        %587 = vxpose.xlu0.c.b16.start [1/8] %v449, 128
        %588 = vxpose.xlu0.c.b16.cont [2/8] %v453, 128
        %589 = vxpose.xlu0.c.b16.cont [3/8] %v457, 128
        %590 = vxpose.xlu0.c.b16.cont [4/8] %v461, 128
        %591 = vxpose.xlu0.c.b16.cont [5/8] %v465, 128
        %592 = vxpose.xlu0.c.b16.cont [6/8] %v469, 128
        %593 = vxpose.xlu0.c.b16.cont [7/8] %v473, 128
        %594 = vxpose.xlu0.c.b16.end [8/8] %v477, 128
        %v595 = vpop.trf.xlu0
        %v596 = vpop.trf.xlu0
        %v597 = vpop.trf.xlu0
        %v598 = vpop.trf.xlu0
        %v599 = vpop.trf.xlu0
        %v600 = vpop.trf.xlu0
        %v601 = vpop.trf.xlu0
        %v602 = vpop.trf.xlu0
        %603 = vxpose.xlu0.c.b16.start [1/8] %v450, 128
        %604 = vxpose.xlu0.c.b16.cont [2/8] %v454, 128
        %605 = vxpose.xlu0.c.b16.cont [3/8] %v458, 128
        %606 = vxpose.xlu0.c.b16.cont [4/8] %v462, 128
        %607 = vxpose.xlu0.c.b16.cont [5/8] %v466, 128
        %608 = vxpose.xlu0.c.b16.cont [6/8] %v470, 128
        %609 = vxpose.xlu0.c.b16.cont [7/8] %v474, 128
        %610 = vxpose.xlu0.c.b16.end [8/8] %v478, 128
        %v611 = vpop.trf.xlu0
        %v612 = vpop.trf.xlu0
        %v613 = vpop.trf.xlu0
        %v614 = vpop.trf.xlu0
        %v615 = vpop.trf.xlu0
        %v616 = vpop.trf.xlu0
        %v617 = vpop.trf.xlu0
        %v618 = vpop.trf.xlu0
        %619 = vxpose.xlu0.c.b16.start [1/8] %v479, 128
        %620 = vxpose.xlu0.c.b16.cont [2/8] %v483, 128
        %621 = vxpose.xlu0.c.b16.cont [3/8] %v487, 128
        %622 = vxpose.xlu0.c.b16.cont [4/8] %v491, 128
        %623 = vxpose.xlu0.c.b16.cont [5/8] %v495, 128
        %624 = vxpose.xlu0.c.b16.cont [6/8] %v499, 128
        %625 = vxpose.xlu0.c.b16.cont [7/8] %v503, 128
        %626 = vxpose.xlu0.c.b16.end [8/8] %v507, 128
        %v627 = vpop.trf.xlu0
        %v628 = vpop.trf.xlu0
        %v629 = vpop.trf.xlu0
        %v630 = vpop.trf.xlu0
        %v631 = vpop.trf.xlu0
        %v632 = vpop.trf.xlu0
        %v633 = vpop.trf.xlu0
        %v634 = vpop.trf.xlu0
        %635 = vxpose.xlu0.c.b16.start [1/8] %v480, 128
        %636 = vxpose.xlu0.c.b16.cont [2/8] %v484, 128
        %637 = vxpose.xlu0.c.b16.cont [3/8] %v488, 128
        %638 = vxpose.xlu0.c.b16.cont [4/8] %v492, 128
        %639 = vxpose.xlu0.c.b16.cont [5/8] %v496, 128
        %640 = vxpose.xlu0.c.b16.cont [6/8] %v500, 128
        %641 = vxpose.xlu0.c.b16.cont [7/8] %v504, 128
        %642 = vxpose.xlu0.c.b16.end [8/8] %v508, 128
        %v643 = vpop.trf.xlu0
        %v644 = vpop.trf.xlu0
        %v645 = vpop.trf.xlu0
        %v646 = vpop.trf.xlu0
        %v647 = vpop.trf.xlu0
        %v648 = vpop.trf.xlu0
        %v649 = vpop.trf.xlu0
        %v650 = vpop.trf.xlu0
        %651 = vxpose.xlu0.c.b16.start [1/8] %v481, 128
        %652 = vxpose.xlu0.c.b16.cont [2/8] %v485, 128
        %653 = vxpose.xlu0.c.b16.cont [3/8] %v489, 128
        %654 = vxpose.xlu0.c.b16.cont [4/8] %v493, 128
        %655 = vxpose.xlu0.c.b16.cont [5/8] %v497, 128
        %656 = vxpose.xlu0.c.b16.cont [6/8] %v501, 128
        %657 = vxpose.xlu0.c.b16.cont [7/8] %v505, 128
        %658 = vxpose.xlu0.c.b16.end [8/8] %v509, 128
        %v659 = vpop.trf.xlu0
        %v660 = vpop.trf.xlu0
        %v661 = vpop.trf.xlu0
        %v662 = vpop.trf.xlu0
        %v663 = vpop.trf.xlu0
        %v664 = vpop.trf.xlu0
        %v665 = vpop.trf.xlu0
        %v666 = vpop.trf.xlu0
        %667 = vxpose.xlu0.c.b16.start [1/8] %v482, 128
        %668 = vxpose.xlu0.c.b16.cont [2/8] %v486, 128
        %669 = vxpose.xlu0.c.b16.cont [3/8] %v490, 128
        %670 = vxpose.xlu0.c.b16.cont [4/8] %v494, 128
        %671 = vxpose.xlu0.c.b16.cont [5/8] %v498, 128
        %672 = vxpose.xlu0.c.b16.cont [6/8] %v502, 128
        %673 = vxpose.xlu0.c.b16.cont [7/8] %v506, 128
        %674 = vxpose.xlu0.c.b16.end [8/8] %v510, 128
        %v675 = vpop.trf.xlu0
        %v676 = vpop.trf.xlu0
        %v677 = vpop.trf.xlu0
        %v678 = vpop.trf.xlu0
        %v679 = vpop.trf.xlu0
        %v680 = vpop.trf.xlu0
        %v681 = vpop.trf.xlu0
        %v682 = vpop.trf.xlu0
        %v715 = vunpack.c.l.b16 %v511
        %v716 = vunpack.c.h.b16 %v511
        %v717 = vunpack.c.l.b16 %v512
        %v718 = vunpack.c.h.b16 %v512
        %v719 = vunpack.c.l.b16 %v513
        %v720 = vunpack.c.h.b16 %v513
        %v721 = vunpack.c.l.b16 %v514
        %v722 = vunpack.c.h.b16 %v514
        %v723 = vunpack.c.l.b16 %v515
        %v724 = vunpack.c.h.b16 %v515
        %v725 = vunpack.c.l.b16 %v516
        %v726 = vunpack.c.h.b16 %v516
        %v727 = vunpack.c.l.b16 %v517
        %v728 = vunpack.c.h.b16 %v517
        %v729 = vunpack.c.l.b16 %v518
        %v730 = vunpack.c.h.b16 %v518
        %v731 = vunpack.c.l.b16 %v519
        %v732 = vunpack.c.h.b16 %v519
        %v733 = vunpack.c.l.b16 %v520
        %v734 = vunpack.c.h.b16 %v520
        %v735 = vunpack.c.l.b16 %v521
        %v736 = vunpack.c.h.b16 %v521
        %v737 = vunpack.c.l.b16 %v522
        %v738 = vunpack.c.h.b16 %v522
        %v739 = vunpack.c.l.b16 %v523
        %v740 = vunpack.c.h.b16 %v523
        %v741 = vunpack.c.l.b16 %v524
        %v742 = vunpack.c.h.b16 %v524
        %v743 = vunpack.c.l.b16 %v525
        %v744 = vunpack.c.h.b16 %v525
        %v745 = vunpack.c.l.b16 %v526
        %v746 = vunpack.c.h.b16 %v526
        %v747 = vunpack.c.l.b16 %v527
        %v748 = vunpack.c.h.b16 %v527
        %v749 = vunpack.c.l.b16 %v528
        %v750 = vunpack.c.h.b16 %v528
        %v751 = vunpack.c.l.b16 %v529
        %v752 = vunpack.c.h.b16 %v529
        %v753 = vunpack.c.l.b16 %v530
        %v754 = vunpack.c.h.b16 %v530
        %v755 = vunpack.c.l.b16 %v531
        %v756 = vunpack.c.h.b16 %v531
        %v757 = vunpack.c.l.b16 %v532
        %v758 = vunpack.c.h.b16 %v532
        %v759 = vunpack.c.l.b16 %v533
        %v760 = vunpack.c.h.b16 %v533
        %v761 = vunpack.c.l.b16 %v534
        %v762 = vunpack.c.h.b16 %v534
        %v763 = vunpack.c.l.b16 %v535
        %v764 = vunpack.c.h.b16 %v535
        %v765 = vunpack.c.l.b16 %v536
        %v766 = vunpack.c.h.b16 %v536
        %v767 = vunpack.c.l.b16 %v537
        %v768 = vunpack.c.h.b16 %v537
        %v769 = vunpack.c.l.b16 %v538
        %v770 = vunpack.c.h.b16 %v538
        %v771 = vunpack.c.l.b16 %v539
        %v772 = vunpack.c.h.b16 %v539
        %v773 = vunpack.c.l.b16 %v540
        %v774 = vunpack.c.h.b16 %v540
        %v775 = vunpack.c.l.b16 %v541
        %v776 = vunpack.c.h.b16 %v541
        %v777 = vunpack.c.l.b16 %v542
        %v778 = vunpack.c.h.b16 %v542
        %v779 = vpack.c.b16 %v717, %v715
        %v780 = vpack.c.b16 %v718, %v716
        %v781 = vpack.c.b16 %v721, %v719
        %v782 = vpack.c.b16 %v722, %v720
        %v783 = vpack.c.b16 %v725, %v723
        %v784 = vpack.c.b16 %v726, %v724
        %v785 = vpack.c.b16 %v729, %v727
        %v786 = vpack.c.b16 %v730, %v728
        %v787 = vpack.c.b16 %v733, %v731
        %v788 = vpack.c.b16 %v734, %v732
        %v789 = vpack.c.b16 %v737, %v735
        %v790 = vpack.c.b16 %v738, %v736
        %v791 = vpack.c.b16 %v741, %v739
        %v792 = vpack.c.b16 %v742, %v740
        %v793 = vpack.c.b16 %v745, %v743
        %v794 = vpack.c.b16 %v746, %v744
        %v795 = vpack.c.b16 %v749, %v747
        %v796 = vpack.c.b16 %v750, %v748
        %v797 = vpack.c.b16 %v753, %v751
        %v798 = vpack.c.b16 %v754, %v752
        %v799 = vpack.c.b16 %v757, %v755
        %v800 = vpack.c.b16 %v758, %v756
        %v801 = vpack.c.b16 %v761, %v759
        %v802 = vpack.c.b16 %v762, %v760
        %v803 = vpack.c.b16 %v765, %v763
        %v804 = vpack.c.b16 %v766, %v764
        %v805 = vpack.c.b16 %v769, %v767
        %v806 = vpack.c.b16 %v770, %v768
        %v807 = vpack.c.b16 %v773, %v771
        %v808 = vpack.c.b16 %v774, %v772
        %v809 = vpack.c.b16 %v777, %v775
        %v810 = vpack.c.b16 %v778, %v776
        %843 = vmatprep.subr.bf16.mxu0 %v794
        %844 = vmatpush1.bf16.msra.mxu0 %v793
        %845 = vmatprep.subr.bf16.mxu0 %v792
        %846 = vmatpush1.bf16.msra.mxu0 %v791
        %847 = vmatprep.subr.bf16.mxu0 %v790
        %848 = vmatpush1.bf16.msra.mxu0 %v789
        %849 = vmatprep.subr.bf16.mxu0 %v788
        %850 = vmatpush1.bf16.msra.mxu0 %v787
        %851 = vmatprep.subr.bf16.mxu0 %v786
        %852 = vmatpush1.bf16.msra.mxu0 %v785
        %853 = vmatprep.subr.bf16.mxu0 %v784
        %854 = vmatpush1.bf16.msra.mxu0 %v783
        %855 = vmatprep.subr.bf16.mxu0 %v782
        %856 = vmatpush1.bf16.msra.mxu0 %v781
        %857 = vmatprep.subr.bf16.mxu0 %v780
        %858 = vmatpush1.bf16.msra.mxu0 %v779
        %859 = vmatprep.subr.bf16.mxu0 %v810
        %860 = vmatpush2.bf16.msra.mxu0 %v809
        %861 = vmatprep.subr.bf16.mxu0 %v808
        %862 = vmatpush2.bf16.msra.mxu0 %v807
        %863 = vmatprep.subr.bf16.mxu0 %v806
        %864 = vmatpush2.bf16.msra.mxu0 %v805
        %865 = vmatprep.subr.bf16.mxu0 %v804
        %866 = vmatpush2.bf16.msra.mxu0 %v803
        %867 = vmatprep.subr.bf16.mxu0 %v802
        %868 = vmatpush2.bf16.msra.mxu0 %v801
        %869 = vmatprep.subr.bf16.mxu0 %v800
        %870 = vmatpush2.bf16.msra.mxu0 %v799
        %871 = vmatprep.subr.bf16.mxu0 %v798
        %872 = vmatpush2.bf16.msra.mxu0 %v797
        %873 = vmatprep.subr.bf16.mxu0 %v796
        %874 = vmatpush2.bf16.msra.mxu0 %v795
        %875 = vmatprep.mubr.bf16.mxu0 %v627
        %876 = vmatmul.mubr.bf16.gmra.mxu0 %v563
        %v877 = vpop.f32.mrf.mxu0
        %v878 = vadd.f32 %v548, %v877
        %v879 = vpop.f32.mrf.mxu0
        %v880 = vadd.f32 %v552, %v879
        %v881 = vpop.f32.mrf.mxu0
        %v882 = vadd.f32 %v548, %v881
        %v883 = vpop.f32.mrf.mxu0
        %v884 = vadd.f32 %v552, %v883
        %885 = vmatprep.mubr.bf16.mxu0 %v628
        %886 = vmatmul.mubr.bf16.gmra.mxu0 %v564
        %v887 = vpop.f32.mrf.mxu0
        %v888 = vadd.f32 %v548, %v887
        %v889 = vpop.f32.mrf.mxu0
        %v890 = vadd.f32 %v552, %v889
        %v891 = vpop.f32.mrf.mxu0
        %v892 = vadd.f32 %v548, %v891
        %v893 = vpop.f32.mrf.mxu0
        %v894 = vadd.f32 %v552, %v893
        %895 = vmatprep.mubr.bf16.mxu0 %v629
        %896 = vmatmul.mubr.bf16.gmra.mxu0 %v565
        %v897 = vpop.f32.mrf.mxu0
        %v898 = vadd.f32 %v548, %v897
        %v899 = vpop.f32.mrf.mxu0
        %v900 = vadd.f32 %v552, %v899
        %v901 = vpop.f32.mrf.mxu0
        %v902 = vadd.f32 %v548, %v901
        %v903 = vpop.f32.mrf.mxu0
        %v904 = vadd.f32 %v552, %v903
        %905 = vmatprep.mubr.bf16.mxu0 %v630
        %906 = vmatmul.mubr.bf16.gmra.mxu0 %v566
        %v907 = vpop.f32.mrf.mxu0
        %v908 = vadd.f32 %v548, %v907
        %v909 = vpop.f32.mrf.mxu0
        %v910 = vadd.f32 %v552, %v909
        %v911 = vpop.f32.mrf.mxu0
        %v912 = vadd.f32 %v548, %v911
        %v913 = vpop.f32.mrf.mxu0
        %v914 = vadd.f32 %v552, %v913
        %915 = vmatprep.mubr.bf16.mxu0 %v631
        %916 = vmatmul.mubr.bf16.gmra.mxu0 %v567
        %v917 = vpop.f32.mrf.mxu0
        %v918 = vadd.f32 %v548, %v917
        %v919 = vpop.f32.mrf.mxu0
        %v920 = vadd.f32 %v552, %v919
        %v921 = vpop.f32.mrf.mxu0
        %v922 = vadd.f32 %v548, %v921
        %v923 = vpop.f32.mrf.mxu0
        %v924 = vadd.f32 %v552, %v923
        %925 = vmatprep.mubr.bf16.mxu0 %v632
        %926 = vmatmul.mubr.bf16.gmra.mxu0 %v568
        %v927 = vpop.f32.mrf.mxu0
        %v928 = vadd.f32 %v548, %v927
        %v929 = vpop.f32.mrf.mxu0
        %v930 = vadd.f32 %v552, %v929
        %v931 = vpop.f32.mrf.mxu0
        %v932 = vadd.f32 %v548, %v931
        %v933 = vpop.f32.mrf.mxu0
        %v934 = vadd.f32 %v552, %v933
        %935 = vmatprep.mubr.bf16.mxu0 %v633
        %936 = vmatmul.mubr.bf16.gmra.mxu0 %v569
        %v937 = vpop.f32.mrf.mxu0
        %v938 = vadd.f32 %v548, %v937
        %v939 = vpop.f32.mrf.mxu0
        %v940 = vadd.f32 %v552, %v939
        %v941 = vpop.f32.mrf.mxu0
        %v942 = vadd.f32 %v548, %v941
        %v943 = vpop.f32.mrf.mxu0
        %v944 = vadd.f32 %v552, %v943
        %945 = vmatprep.mubr.bf16.mxu0 %v634
        %946 = vmatmul.mubr.bf16.gmra.mxu0 %v570
        %v947 = vpop.f32.mrf.mxu0
        %v948 = vadd.f32 %v548, %v947
        %v949 = vpop.f32.mrf.mxu0
        %v950 = vadd.f32 %v552, %v949
        %v951 = vpop.f32.mrf.mxu0
        %v952 = vadd.f32 %v548, %v951
        %v953 = vpop.f32.mrf.mxu0
        %v954 = vadd.f32 %v552, %v953
        %955 = vmatprep.mubr.bf16.mxu0 %v643
        %956 = vmatmul.mubr.bf16.gmra.mxu0 %v579
        %v957 = vpop.f32.mrf.mxu0
        %v958 = vadd.f32 %v548, %v957
        %v959 = vpop.f32.mrf.mxu0
        %v960 = vadd.f32 %v552, %v959
        %v961 = vpop.f32.mrf.mxu0
        %v962 = vadd.f32 %v548, %v961
        %v963 = vpop.f32.mrf.mxu0
        %v964 = vadd.f32 %v552, %v963
        %965 = vmatprep.mubr.bf16.mxu0 %v644
        %966 = vmatmul.mubr.bf16.gmra.mxu0 %v580
        %v967 = vpop.f32.mrf.mxu0
        %v968 = vadd.f32 %v548, %v967
        %v969 = vpop.f32.mrf.mxu0
        %v970 = vadd.f32 %v552, %v969
        %v971 = vpop.f32.mrf.mxu0
        %v972 = vadd.f32 %v548, %v971
        %v973 = vpop.f32.mrf.mxu0
        %v974 = vadd.f32 %v552, %v973
        %975 = vmatprep.mubr.bf16.mxu0 %v645
        %976 = vmatmul.mubr.bf16.gmra.mxu0 %v581
        %v977 = vpop.f32.mrf.mxu0
        %v978 = vadd.f32 %v548, %v977
        %v979 = vpop.f32.mrf.mxu0
        %v980 = vadd.f32 %v552, %v979
        %v981 = vpop.f32.mrf.mxu0
        %v982 = vadd.f32 %v548, %v981
        %v983 = vpop.f32.mrf.mxu0
        %v984 = vadd.f32 %v552, %v983
        %985 = vmatprep.mubr.bf16.mxu0 %v646
        %986 = vmatmul.mubr.bf16.gmra.mxu0 %v582
        %v987 = vpop.f32.mrf.mxu0
        %v988 = vadd.f32 %v548, %v987
        %v989 = vpop.f32.mrf.mxu0
        %v990 = vadd.f32 %v552, %v989
        %v991 = vpop.f32.mrf.mxu0
        %v992 = vadd.f32 %v548, %v991
        %v993 = vpop.f32.mrf.mxu0
        %v994 = vadd.f32 %v552, %v993
        %995 = vmatprep.mubr.bf16.mxu0 %v647
        %996 = vmatmul.mubr.bf16.gmra.mxu0 %v583
        %v997 = vpop.f32.mrf.mxu0
        %v998 = vadd.f32 %v548, %v997
        %v999 = vpop.f32.mrf.mxu0
        %v1000 = vadd.f32 %v552, %v999
        %v1001 = vpop.f32.mrf.mxu0
        %v1002 = vadd.f32 %v548, %v1001
        %v1003 = vpop.f32.mrf.mxu0
        %v1004 = vadd.f32 %v552, %v1003
        %1005 = vmatprep.mubr.bf16.mxu0 %v648
        %1006 = vmatmul.mubr.bf16.gmra.mxu0 %v584
        %v1007 = vpop.f32.mrf.mxu0
        %v1008 = vadd.f32 %v548, %v1007
        %v1009 = vpop.f32.mrf.mxu0
        %v1010 = vadd.f32 %v552, %v1009
        %v1011 = vpop.f32.mrf.mxu0
        %v1012 = vadd.f32 %v548, %v1011
        %v1013 = vpop.f32.mrf.mxu0
        %v1014 = vadd.f32 %v552, %v1013
        %1015 = vmatprep.mubr.bf16.mxu0 %v649
        %1016 = vmatmul.mubr.bf16.gmra.mxu0 %v585
        %v1017 = vpop.f32.mrf.mxu0
        %v1018 = vadd.f32 %v548, %v1017
        %v1019 = vpop.f32.mrf.mxu0
        %v1020 = vadd.f32 %v552, %v1019
        %v1021 = vpop.f32.mrf.mxu0
        %v1022 = vadd.f32 %v548, %v1021
        %v1023 = vpop.f32.mrf.mxu0
        %v1024 = vadd.f32 %v552, %v1023
        %1025 = vmatprep.mubr.bf16.mxu0 %v650
        %1026 = vmatmul.mubr.bf16.gmra.mxu0 %v586
        %v1027 = vpop.f32.mrf.mxu0
        %v1028 = vadd.f32 %v548, %v1027
        %v1029 = vpop.f32.mrf.mxu0
        %v1030 = vadd.f32 %v552, %v1029
        %v1031 = vpop.f32.mrf.mxu0
        %v1032 = vadd.f32 %v548, %v1031
        %v1033 = vpop.f32.mrf.mxu0
        %v1034 = vadd.f32 %v552, %v1033
        %1035 = vmatprep.mubr.bf16.mxu0 %v659
        %1036 = vmatmul.mubr.bf16.gmra.mxu0 %v595
        %v1037 = vpop.f32.mrf.mxu0
        %v1038 = vadd.f32 %v548, %v1037
        %v1039 = vpop.f32.mrf.mxu0
        %v1040 = vadd.f32 %v552, %v1039
        %v1041 = vpop.f32.mrf.mxu0
        %v1042 = vadd.f32 %v548, %v1041
        %v1043 = vpop.f32.mrf.mxu0
        %v1044 = vadd.f32 %v552, %v1043
        %1045 = vmatprep.mubr.bf16.mxu0 %v660
        %1046 = vmatmul.mubr.bf16.gmra.mxu0 %v596
        %v1047 = vpop.f32.mrf.mxu0
        %v1048 = vadd.f32 %v548, %v1047
        %v1049 = vpop.f32.mrf.mxu0
        %v1050 = vadd.f32 %v552, %v1049
        %v1051 = vpop.f32.mrf.mxu0
        %v1052 = vadd.f32 %v548, %v1051
        %v1053 = vpop.f32.mrf.mxu0
        %v1054 = vadd.f32 %v552, %v1053
        %1055 = vmatprep.mubr.bf16.mxu0 %v661
        %1056 = vmatmul.mubr.bf16.gmra.mxu0 %v597
        %v1057 = vpop.f32.mrf.mxu0
        %v1058 = vadd.f32 %v548, %v1057
        %v1059 = vpop.f32.mrf.mxu0
        %v1060 = vadd.f32 %v552, %v1059
        %v1061 = vpop.f32.mrf.mxu0
        %v1062 = vadd.f32 %v548, %v1061
        %v1063 = vpop.f32.mrf.mxu0
        %v1064 = vadd.f32 %v552, %v1063
        %1065 = vmatprep.mubr.bf16.mxu0 %v662
        %1066 = vmatmul.mubr.bf16.gmra.mxu0 %v598
        %v1067 = vpop.f32.mrf.mxu0
        %v1068 = vadd.f32 %v548, %v1067
        %v1069 = vpop.f32.mrf.mxu0
        %v1070 = vadd.f32 %v552, %v1069
        %v1071 = vpop.f32.mrf.mxu0
        %v1072 = vadd.f32 %v548, %v1071
        %v1073 = vpop.f32.mrf.mxu0
        %v1074 = vadd.f32 %v552, %v1073
        %1075 = vmatprep.mubr.bf16.mxu0 %v663
        %1076 = vmatmul.mubr.bf16.gmra.mxu0 %v599
        %v1077 = vpop.f32.mrf.mxu0
        %v1078 = vadd.f32 %v548, %v1077
        %v1079 = vpop.f32.mrf.mxu0
        %v1080 = vadd.f32 %v552, %v1079
        %v1081 = vpop.f32.mrf.mxu0
        %v1082 = vadd.f32 %v548, %v1081
        %v1083 = vpop.f32.mrf.mxu0
        %v1084 = vadd.f32 %v552, %v1083
        %1085 = vmatprep.mubr.bf16.mxu0 %v664
        %1086 = vmatmul.mubr.bf16.gmra.mxu0 %v600
        %v1087 = vpop.f32.mrf.mxu0
        %v1088 = vadd.f32 %v548, %v1087
        %v1089 = vpop.f32.mrf.mxu0
        %v1090 = vadd.f32 %v552, %v1089
        %v1091 = vpop.f32.mrf.mxu0
        %v1092 = vadd.f32 %v548, %v1091
        %v1093 = vpop.f32.mrf.mxu0
        %v1094 = vadd.f32 %v552, %v1093
        %1095 = vmatprep.mubr.bf16.mxu0 %v665
        %1096 = vmatmul.mubr.bf16.gmra.mxu0 %v601
        %v1097 = vpop.f32.mrf.mxu0
        %v1098 = vadd.f32 %v548, %v1097
        %v1099 = vpop.f32.mrf.mxu0
        %v1100 = vadd.f32 %v552, %v1099
        %v1101 = vpop.f32.mrf.mxu0
        %v1102 = vadd.f32 %v548, %v1101
        %v1103 = vpop.f32.mrf.mxu0
        %v1104 = vadd.f32 %v552, %v1103
        %1105 = vmatprep.mubr.bf16.mxu0 %v666
        %1106 = vmatmul.mubr.bf16.gmra.mxu0 %v602
        %v1107 = vpop.f32.mrf.mxu0
        %v1108 = vadd.f32 %v548, %v1107
        %v1109 = vpop.f32.mrf.mxu0
        %v1110 = vadd.f32 %v552, %v1109
        %v1111 = vpop.f32.mrf.mxu0
        %v1112 = vadd.f32 %v548, %v1111
        %v1113 = vpop.f32.mrf.mxu0
        %v1114 = vadd.f32 %v552, %v1113
        %1115 = vmatprep.mubr.bf16.mxu0 %v675
        %1116 = vmatmul.mubr.bf16.gmra.mxu0 %v611
        %v1117 = vpop.f32.mrf.mxu0
        %v1118 = vadd.f32 %v548, %v1117
        %v1119 = vpop.f32.mrf.mxu0
        %v1120 = vadd.f32 %v552, %v1119
        %v1121 = vpop.f32.mrf.mxu0
        %v1122 = vadd.f32 %v548, %v1121
        %v1123 = vpop.f32.mrf.mxu0
        %v1124 = vadd.f32 %v552, %v1123
        %1125 = vmatprep.mubr.bf16.mxu0 %v676
        %1126 = vmatmul.mubr.bf16.gmra.mxu0 %v612
        %v1127 = vpop.f32.mrf.mxu0
        %v1128 = vadd.f32 %v548, %v1127
        %v1129 = vpop.f32.mrf.mxu0
        %v1130 = vadd.f32 %v552, %v1129
        %v1131 = vpop.f32.mrf.mxu0
        %v1132 = vadd.f32 %v548, %v1131
        %v1133 = vpop.f32.mrf.mxu0
        %v1134 = vadd.f32 %v552, %v1133
        %1135 = vmatprep.mubr.bf16.mxu0 %v677
        %1136 = vmatmul.mubr.bf16.gmra.mxu0 %v613
        %v1137 = vpop.f32.mrf.mxu0
        %v1138 = vadd.f32 %v548, %v1137
        %v1139 = vpop.f32.mrf.mxu0
        %v1140 = vadd.f32 %v552, %v1139
        %v1141 = vpop.f32.mrf.mxu0
        %v1142 = vadd.f32 %v548, %v1141
        %v1143 = vpop.f32.mrf.mxu0
        %v1144 = vadd.f32 %v552, %v1143
        %1145 = vmatprep.mubr.bf16.mxu0 %v678
        %1146 = vmatmul.mubr.bf16.gmra.mxu0 %v614
        %v1147 = vpop.f32.mrf.mxu0
        %v1148 = vadd.f32 %v548, %v1147
        %v1149 = vpop.f32.mrf.mxu0
        %v1150 = vadd.f32 %v552, %v1149
        %v1151 = vpop.f32.mrf.mxu0
        %v1152 = vadd.f32 %v548, %v1151
        %v1153 = vpop.f32.mrf.mxu0
        %v1154 = vadd.f32 %v552, %v1153
        %1155 = vmatprep.mubr.bf16.mxu0 %v679
        %1156 = vmatmul.mubr.bf16.gmra.mxu0 %v615
        %v1157 = vpop.f32.mrf.mxu0
        %v1158 = vadd.f32 %v548, %v1157
        %v1159 = vpop.f32.mrf.mxu0
        %v1160 = vadd.f32 %v552, %v1159
        %v1161 = vpop.f32.mrf.mxu0
        %v1162 = vadd.f32 %v548, %v1161
        %v1163 = vpop.f32.mrf.mxu0
        %v1164 = vadd.f32 %v552, %v1163
        %1165 = vmatprep.mubr.bf16.mxu0 %v680
        %1166 = vmatmul.mubr.bf16.gmra.mxu0 %v616
        %v1167 = vpop.f32.mrf.mxu0
        %v1168 = vadd.f32 %v548, %v1167
        %v1169 = vpop.f32.mrf.mxu0
        %v1170 = vadd.f32 %v552, %v1169
        %v1171 = vpop.f32.mrf.mxu0
        %v1172 = vadd.f32 %v548, %v1171
        %v1173 = vpop.f32.mrf.mxu0
        %v1174 = vadd.f32 %v552, %v1173
        %1175 = vmatprep.mubr.bf16.mxu0 %v681
        %1176 = vmatmul.mubr.bf16.gmra.mxu0 %v617
        %v1177 = vpop.f32.mrf.mxu0
        %v1178 = vadd.f32 %v548, %v1177
        %v1179 = vpop.f32.mrf.mxu0
        %v1180 = vadd.f32 %v552, %v1179
        %v1181 = vpop.f32.mrf.mxu0
        %v1182 = vadd.f32 %v548, %v1181
        %v1183 = vpop.f32.mrf.mxu0
        %v1184 = vadd.f32 %v552, %v1183
        %1185 = vmatprep.mubr.bf16.mxu0 %v682
        %1186 = vmatmul.mubr.bf16.gmra.mxu0 %v618
        %v1187 = vpop.f32.mrf.mxu0
        %v1188 = vadd.f32 %v548, %v1187
        %v1189 = vpop.f32.mrf.mxu0
        %v1190 = vadd.f32 %v552, %v1189
        %v1191 = vpop.f32.mrf.mxu0
        %v1192 = vadd.f32 %v548, %v1191
        %v1193 = vpop.f32.mrf.mxu0
        %v1194 = vadd.f32 %v552, %v1193
        %1195 = vdwg.mxu0
        %v1196 = vpack.c.bf16 %v882, %v878
        %v1197 = vpack.c.bf16 %v884, %v880
        %v1198 = vpack.c.bf16 %v892, %v888
        %v1199 = vpack.c.bf16 %v894, %v890
        %v1200 = vpack.c.bf16 %v902, %v898
        %v1201 = vpack.c.bf16 %v904, %v900
        %v1202 = vpack.c.bf16 %v912, %v908
        %v1203 = vpack.c.bf16 %v914, %v910
        %v1204 = vpack.c.bf16 %v922, %v918
        %v1205 = vpack.c.bf16 %v924, %v920
        %v1206 = vpack.c.bf16 %v932, %v928
        %v1207 = vpack.c.bf16 %v934, %v930
        %v1208 = vpack.c.bf16 %v942, %v938
        %v1209 = vpack.c.bf16 %v944, %v940
        %v1210 = vpack.c.bf16 %v952, %v948
        %v1211 = vpack.c.bf16 %v954, %v950
        %v1212 = vpack.c.bf16 %v962, %v958
        %v1213 = vpack.c.bf16 %v964, %v960
        %v1214 = vpack.c.bf16 %v972, %v968
        %v1215 = vpack.c.bf16 %v974, %v970
        %v1216 = vpack.c.bf16 %v982, %v978
        %v1217 = vpack.c.bf16 %v984, %v980
        %v1218 = vpack.c.bf16 %v992, %v988
        %v1219 = vpack.c.bf16 %v994, %v990
        %v1220 = vpack.c.bf16 %v1002, %v998
        %v1221 = vpack.c.bf16 %v1004, %v1000
        %v1222 = vpack.c.bf16 %v1012, %v1008
        %v1223 = vpack.c.bf16 %v1014, %v1010
        %v1224 = vpack.c.bf16 %v1022, %v1018
        %v1225 = vpack.c.bf16 %v1024, %v1020
        %v1226 = vpack.c.bf16 %v1032, %v1028
        %v1227 = vpack.c.bf16 %v1034, %v1030
        %v1228 = vpack.c.bf16 %v1042, %v1038
        %v1229 = vpack.c.bf16 %v1044, %v1040
        %v1230 = vpack.c.bf16 %v1052, %v1048
        %v1231 = vpack.c.bf16 %v1054, %v1050
        %v1232 = vpack.c.bf16 %v1062, %v1058
        %v1233 = vpack.c.bf16 %v1064, %v1060
        %v1234 = vpack.c.bf16 %v1072, %v1068
        %v1235 = vpack.c.bf16 %v1074, %v1070
        %v1236 = vpack.c.bf16 %v1082, %v1078
        %v1237 = vpack.c.bf16 %v1084, %v1080
        %v1238 = vpack.c.bf16 %v1092, %v1088
        %v1239 = vpack.c.bf16 %v1094, %v1090
        %v1240 = vpack.c.bf16 %v1102, %v1098
        %v1241 = vpack.c.bf16 %v1104, %v1100
        %v1242 = vpack.c.bf16 %v1112, %v1108
        %v1243 = vpack.c.bf16 %v1114, %v1110
        %v1244 = vpack.c.bf16 %v1122, %v1118
        %v1245 = vpack.c.bf16 %v1124, %v1120
        %v1246 = vpack.c.bf16 %v1132, %v1128
        %v1247 = vpack.c.bf16 %v1134, %v1130
        %v1248 = vpack.c.bf16 %v1142, %v1138
        %v1249 = vpack.c.bf16 %v1144, %v1140
        %v1250 = vpack.c.bf16 %v1152, %v1148
        %v1251 = vpack.c.bf16 %v1154, %v1150
        %v1252 = vpack.c.bf16 %v1162, %v1158
        %v1253 = vpack.c.bf16 %v1164, %v1160
        %v1254 = vpack.c.bf16 %v1172, %v1168
        %v1255 = vpack.c.bf16 %v1174, %v1170
        %v1256 = vpack.c.bf16 %v1182, %v1178
        %v1257 = vpack.c.bf16 %v1184, %v1180
        %v1258 = vpack.c.bf16 %v1192, %v1188
        %v1259 = vpack.c.bf16 %v1194, %v1190
        %v1324 = vunpack.c.l.b16 %v1196
        %v1325 = vunpack.c.l.b16 %v1197
        %v1326 = vunpack.c.h.b16 %v1196
        %v1327 = vunpack.c.h.b16 %v1197
        %v1328 = vunpack.c.l.b16 %v1198
        %v1329 = vunpack.c.l.b16 %v1199
        %v1330 = vunpack.c.h.b16 %v1198
        %v1331 = vunpack.c.h.b16 %v1199
        %v1332 = vunpack.c.l.b16 %v1200
        %v1333 = vunpack.c.l.b16 %v1201
        %v1334 = vunpack.c.h.b16 %v1200
        %v1335 = vunpack.c.h.b16 %v1201
        %v1336 = vunpack.c.l.b16 %v1202
        %v1337 = vunpack.c.l.b16 %v1203
        %v1338 = vunpack.c.h.b16 %v1202
        %v1339 = vunpack.c.h.b16 %v1203
        %v1340 = vunpack.c.l.b16 %v1204
        %v1341 = vunpack.c.l.b16 %v1205
        %v1342 = vunpack.c.h.b16 %v1204
        %v1343 = vunpack.c.h.b16 %v1205
        %v1344 = vunpack.c.l.b16 %v1206
        %v1345 = vunpack.c.l.b16 %v1207
        %v1346 = vunpack.c.h.b16 %v1206
        %v1347 = vunpack.c.h.b16 %v1207
        %v1348 = vunpack.c.l.b16 %v1208
        %v1349 = vunpack.c.l.b16 %v1209
        %v1350 = vunpack.c.h.b16 %v1208
        %v1351 = vunpack.c.h.b16 %v1209
        %v1352 = vunpack.c.l.b16 %v1210
        %v1353 = vunpack.c.l.b16 %v1211
        %v1354 = vunpack.c.h.b16 %v1210
        %v1355 = vunpack.c.h.b16 %v1211
        %v1356 = vunpack.c.l.b16 %v1212
        %v1357 = vunpack.c.l.b16 %v1213
        %v1358 = vunpack.c.h.b16 %v1212
        %v1359 = vunpack.c.h.b16 %v1213
        %v1360 = vunpack.c.l.b16 %v1214
        %v1361 = vunpack.c.l.b16 %v1215
        %v1362 = vunpack.c.h.b16 %v1214
        %v1363 = vunpack.c.h.b16 %v1215
        %v1364 = vunpack.c.l.b16 %v1216
        %v1365 = vunpack.c.l.b16 %v1217
        %v1366 = vunpack.c.h.b16 %v1216
        %v1367 = vunpack.c.h.b16 %v1217
        %v1368 = vunpack.c.l.b16 %v1218
        %v1369 = vunpack.c.l.b16 %v1219
        %v1370 = vunpack.c.h.b16 %v1218
        %v1371 = vunpack.c.h.b16 %v1219
        %v1372 = vunpack.c.l.b16 %v1220
        %v1373 = vunpack.c.l.b16 %v1221
        %v1374 = vunpack.c.h.b16 %v1220
        %v1375 = vunpack.c.h.b16 %v1221
        %v1376 = vunpack.c.l.b16 %v1222
        %v1377 = vunpack.c.l.b16 %v1223
        %v1378 = vunpack.c.h.b16 %v1222
        %v1379 = vunpack.c.h.b16 %v1223
        %v1380 = vunpack.c.l.b16 %v1224
        %v1381 = vunpack.c.l.b16 %v1225
        %v1382 = vunpack.c.h.b16 %v1224
        %v1383 = vunpack.c.h.b16 %v1225
        %v1384 = vunpack.c.l.b16 %v1226
        %v1385 = vunpack.c.l.b16 %v1227
        %v1386 = vunpack.c.h.b16 %v1226
        %v1387 = vunpack.c.h.b16 %v1227
        %v1388 = vunpack.c.l.b16 %v1228
        %v1389 = vunpack.c.l.b16 %v1229
        %v1390 = vunpack.c.h.b16 %v1228
        %v1391 = vunpack.c.h.b16 %v1229
        %v1392 = vunpack.c.l.b16 %v1230
        %v1393 = vunpack.c.l.b16 %v1231
        %v1394 = vunpack.c.h.b16 %v1230
        %v1395 = vunpack.c.h.b16 %v1231
        %v1396 = vunpack.c.l.b16 %v1232
        %v1397 = vunpack.c.l.b16 %v1233
        %v1398 = vunpack.c.h.b16 %v1232
        %v1399 = vunpack.c.h.b16 %v1233
        %v1400 = vunpack.c.l.b16 %v1234
        %v1401 = vunpack.c.l.b16 %v1235
        %v1402 = vunpack.c.h.b16 %v1234
        %v1403 = vunpack.c.h.b16 %v1235
        %v1404 = vunpack.c.l.b16 %v1236
        %v1405 = vunpack.c.l.b16 %v1237
        %v1406 = vunpack.c.h.b16 %v1236
        %v1407 = vunpack.c.h.b16 %v1237
        %v1408 = vunpack.c.l.b16 %v1238
        %v1409 = vunpack.c.l.b16 %v1239
        %v1410 = vunpack.c.h.b16 %v1238
        %v1411 = vunpack.c.h.b16 %v1239
        %v1412 = vunpack.c.l.b16 %v1240
        %v1413 = vunpack.c.l.b16 %v1241
        %v1414 = vunpack.c.h.b16 %v1240
        %v1415 = vunpack.c.h.b16 %v1241
        %v1416 = vunpack.c.l.b16 %v1242
        %v1417 = vunpack.c.l.b16 %v1243
        %v1418 = vunpack.c.h.b16 %v1242
        %v1419 = vunpack.c.h.b16 %v1243
        %v1420 = vunpack.c.l.b16 %v1244
        %v1421 = vunpack.c.l.b16 %v1245
        %v1422 = vunpack.c.h.b16 %v1244
        %v1423 = vunpack.c.h.b16 %v1245
        %v1424 = vunpack.c.l.b16 %v1246
        %v1425 = vunpack.c.l.b16 %v1247
        %v1426 = vunpack.c.h.b16 %v1246
        %v1427 = vunpack.c.h.b16 %v1247
        %v1428 = vunpack.c.l.b16 %v1248
        %v1429 = vunpack.c.l.b16 %v1249
        %v1430 = vunpack.c.h.b16 %v1248
        %v1431 = vunpack.c.h.b16 %v1249
        %v1432 = vunpack.c.l.b16 %v1250
        %v1433 = vunpack.c.l.b16 %v1251
        %v1434 = vunpack.c.h.b16 %v1250
        %v1435 = vunpack.c.h.b16 %v1251
        %v1436 = vunpack.c.l.b16 %v1252
        %v1437 = vunpack.c.l.b16 %v1253
        %v1438 = vunpack.c.h.b16 %v1252
        %v1439 = vunpack.c.h.b16 %v1253
        %v1440 = vunpack.c.l.b16 %v1254
        %v1441 = vunpack.c.l.b16 %v1255
        %v1442 = vunpack.c.h.b16 %v1254
        %v1443 = vunpack.c.h.b16 %v1255
        %v1444 = vunpack.c.l.b16 %v1256
        %v1445 = vunpack.c.l.b16 %v1257
        %v1446 = vunpack.c.h.b16 %v1256
        %v1447 = vunpack.c.h.b16 %v1257
        %v1448 = vunpack.c.l.b16 %v1258
        %v1449 = vunpack.c.l.b16 %v1259
        %v1450 = vunpack.c.h.b16 %v1258
        %v1451 = vunpack.c.h.b16 %v1259
        %v1452 = vpack.c.b16 %v1325, %v1324
        %v1453 = vpack.c.b16 %v1327, %v1326
        %v1454 = vpack.c.b16 %v1329, %v1328
        %v1455 = vpack.c.b16 %v1331, %v1330
        %v1456 = vpack.c.b16 %v1333, %v1332
        %v1457 = vpack.c.b16 %v1335, %v1334
        %v1458 = vpack.c.b16 %v1337, %v1336
        %v1459 = vpack.c.b16 %v1339, %v1338
        %v1460 = vpack.c.b16 %v1341, %v1340
        %v1461 = vpack.c.b16 %v1343, %v1342
        %v1462 = vpack.c.b16 %v1345, %v1344
        %v1463 = vpack.c.b16 %v1347, %v1346
        %v1464 = vpack.c.b16 %v1349, %v1348
        %v1465 = vpack.c.b16 %v1351, %v1350
        %v1466 = vpack.c.b16 %v1353, %v1352
        %v1467 = vpack.c.b16 %v1355, %v1354
        %v1468 = vpack.c.b16 %v1357, %v1356
        %v1469 = vpack.c.b16 %v1359, %v1358
        %v1470 = vpack.c.b16 %v1361, %v1360
        %v1471 = vpack.c.b16 %v1363, %v1362
        %v1472 = vpack.c.b16 %v1365, %v1364
        %v1473 = vpack.c.b16 %v1367, %v1366
        %v1474 = vpack.c.b16 %v1369, %v1368
        %v1475 = vpack.c.b16 %v1371, %v1370
        %v1476 = vpack.c.b16 %v1373, %v1372
        %v1477 = vpack.c.b16 %v1375, %v1374
        %v1478 = vpack.c.b16 %v1377, %v1376
        %v1479 = vpack.c.b16 %v1379, %v1378
        %v1480 = vpack.c.b16 %v1381, %v1380
        %v1481 = vpack.c.b16 %v1383, %v1382
        %v1482 = vpack.c.b16 %v1385, %v1384
        %v1483 = vpack.c.b16 %v1387, %v1386
        %v1484 = vpack.c.b16 %v1389, %v1388
        %v1485 = vpack.c.b16 %v1391, %v1390
        %v1486 = vpack.c.b16 %v1393, %v1392
        %v1487 = vpack.c.b16 %v1395, %v1394
        %v1488 = vpack.c.b16 %v1397, %v1396
        %v1489 = vpack.c.b16 %v1399, %v1398
        %v1490 = vpack.c.b16 %v1401, %v1400
        %v1491 = vpack.c.b16 %v1403, %v1402
        %v1492 = vpack.c.b16 %v1405, %v1404
        %v1493 = vpack.c.b16 %v1407, %v1406
        %v1494 = vpack.c.b16 %v1409, %v1408
        %v1495 = vpack.c.b16 %v1411, %v1410
        %v1496 = vpack.c.b16 %v1413, %v1412
        %v1497 = vpack.c.b16 %v1415, %v1414
        %v1498 = vpack.c.b16 %v1417, %v1416
        %v1499 = vpack.c.b16 %v1419, %v1418
        %v1500 = vpack.c.b16 %v1421, %v1420
        %v1501 = vpack.c.b16 %v1423, %v1422
        %v1502 = vpack.c.b16 %v1425, %v1424
        %v1503 = vpack.c.b16 %v1427, %v1426
        %v1504 = vpack.c.b16 %v1429, %v1428
        %v1505 = vpack.c.b16 %v1431, %v1430
        %v1506 = vpack.c.b16 %v1433, %v1432
        %v1507 = vpack.c.b16 %v1435, %v1434
        %v1508 = vpack.c.b16 %v1437, %v1436
        %v1509 = vpack.c.b16 %v1439, %v1438
        %v1510 = vpack.c.b16 %v1441, %v1440
        %v1511 = vpack.c.b16 %v1443, %v1442
        %v1512 = vpack.c.b16 %v1445, %v1444
        %v1513 = vpack.c.b16 %v1447, %v1446
        %v1514 = vpack.c.b16 %v1449, %v1448
        %v1515 = vpack.c.b16 %v1451, %v1450
        %1580 = vst [vmem:[%s308] sm:$0xff] %v1452
        %1581 = vst [vmem:[%s308 + $0x8] sm:$0xff] %v1453
        %1582 = vst [vmem:[%s308 + $0x10] sm:$0xff] %v1454
        %1583 = vst [vmem:[%s308 + $0x18] sm:$0xff] %v1455
        %1584 = vst [vmem:[%s308 + $0x20] sm:$0xff] %v1456
        %1585 = vst [vmem:[%s308 + $0x28] sm:$0xff] %v1457
        %1586 = vst [vmem:[%s308 + $0x30] sm:$0xff] %v1458
        %1587 = vst [vmem:[%s308 + $0x38] sm:$0xff] %v1459
        %1588 = vst [vmem:[%s308 + $0x40] sm:$0xff] %v1460
        %1589 = vst [vmem:[%s308 + $0x48] sm:$0xff] %v1461
        %1590 = vst [vmem:[%s308 + $0x50] sm:$0xff] %v1462
        %1591 = vst [vmem:[%s308 + $0x58] sm:$0xff] %v1463
        %1592 = vst [vmem:[%s308 + $0x60] sm:$0xff] %v1464
        %1593 = vst [vmem:[%s308 + $0x68] sm:$0xff] %v1465
        %1594 = vst [vmem:[%s308 + $0x70] sm:$0xff] %v1466
        %1595 = vst [vmem:[%s308 + $0x78] sm:$0xff] %v1467
        %1596 = vst [vmem:[%s308 + $0x80] sm:$0xff] %v1468
        %1597 = vst [vmem:[%s308 + $0x88] sm:$0xff] %v1469
        %1598 = vst [vmem:[%s308 + $0x90] sm:$0xff] %v1470
        %1599 = vst [vmem:[%s308 + $0x98] sm:$0xff] %v1471
        %1600 = vst [vmem:[%s308 + $0xa0] sm:$0xff] %v1472
        %1601 = vst [vmem:[%s308 + $0xa8] sm:$0xff] %v1473
        %1602 = vst [vmem:[%s308 + $0xb0] sm:$0xff] %v1474
        %1603 = vst [vmem:[%s308 + $0xb8] sm:$0xff] %v1475
        %1604 = vst [vmem:[%s308 + $0xc0] sm:$0xff] %v1476
        %1605 = vst [vmem:[%s308 + $0xc8] sm:$0xff] %v1477
        %1606 = vst [vmem:[%s308 + $0xd0] sm:$0xff] %v1478
        %1607 = vst [vmem:[%s308 + $0xd8] sm:$0xff] %v1479
        %1608 = vst [vmem:[%s308 + $0xe0] sm:$0xff] %v1480
        %1609 = vst [vmem:[%s308 + $0xe8] sm:$0xff] %v1481
        %1610 = vst [vmem:[%s308 + $0xf0] sm:$0xff] %v1482
        %1611 = vst [vmem:[%s308 + $0xf8] sm:$0xff] %v1483
        %1612 = vst [vmem:[%s308 + $0x100] sm:$0xff] %v1484
        %1613 = vst [vmem:[%s308 + $0x108] sm:$0xff] %v1485
        %1614 = vst [vmem:[%s308 + $0x110] sm:$0xff] %v1486
        %1615 = vst [vmem:[%s308 + $0x118] sm:$0xff] %v1487
        %1616 = vst [vmem:[%s308 + $0x120] sm:$0xff] %v1488
        %1617 = vst [vmem:[%s308 + $0x128] sm:$0xff] %v1489
        %1618 = vst [vmem:[%s308 + $0x130] sm:$0xff] %v1490
        %1619 = vst [vmem:[%s308 + $0x138] sm:$0xff] %v1491
        %1620 = vst [vmem:[%s308 + $0x140] sm:$0xff] %v1492
        %1621 = vst [vmem:[%s308 + $0x148] sm:$0xff] %v1493
        %1622 = vst [vmem:[%s308 + $0x150] sm:$0xff] %v1494
        %1623 = vst [vmem:[%s308 + $0x158] sm:$0xff] %v1495
        %1624 = vst [vmem:[%s308 + $0x160] sm:$0xff] %v1496
        %1625 = vst [vmem:[%s308 + $0x168] sm:$0xff] %v1497
        %1626 = vst [vmem:[%s308 + $0x170] sm:$0xff] %v1498
        %1627 = vst [vmem:[%s308 + $0x178] sm:$0xff] %v1499
        %1628 = vst [vmem:[%s308 + $0x180] sm:$0xff] %v1500
        %1629 = vst [vmem:[%s308 + $0x188] sm:$0xff] %v1501
        %1630 = vst [vmem:[%s308 + $0x190] sm:$0xff] %v1502
        %1631 = vst [vmem:[%s308 + $0x198] sm:$0xff] %v1503
        %1632 = vst [vmem:[%s308 + $0x1a0] sm:$0xff] %v1504
        %1633 = vst [vmem:[%s308 + $0x1a8] sm:$0xff] %v1505
        %1634 = vst [vmem:[%s308 + $0x1b0] sm:$0xff] %v1506
        %1635 = vst [vmem:[%s308 + $0x1b8] sm:$0xff] %v1507
        %1636 = vst [vmem:[%s308 + $0x1c0] sm:$0xff] %v1508
        %1637 = vst [vmem:[%s308 + $0x1c8] sm:$0xff] %v1509
        %1638 = vst [vmem:[%s308 + $0x1d0] sm:$0xff] %v1510
        %1639 = vst [vmem:[%s308 + $0x1d8] sm:$0xff] %v1511
        %1640 = vst [vmem:[%s308 + $0x1e0] sm:$0xff] %v1512
        %1641 = vst [vmem:[%s308 + $0x1e8] sm:$0xff] %v1513
        %1642 = vst [vmem:[%s308 + $0x1f0] sm:$0xff] %v1514
        %1643 = vst [vmem:[%s308 + $0x1f8] sm:$0xff] %v1515
        %v1644 = vld [vmem:[%s3] sm:$0xf]
        %v1645 = vld [vmem:[%s3 + $0x4] sm:$0xf]
        %v1646 = vld [vmem:[%s3 + $0x8] sm:$0xf]
        %v1647 = vld [vmem:[%s3 + $0xc] sm:$0xf]
        %v1648 = vld [vmem:[%s3 + $0x10] sm:$0xf]
        %v1649 = vld [vmem:[%s3 + $0x14] sm:$0xf]
        %v1650 = vld [vmem:[%s3 + $0x18] sm:$0xf]
        %v1651 = vld [vmem:[%s3 + $0x1c] sm:$0xf]
        %v1652 = vld [vmem:[%s3 + $0x20] sm:$0xf]
        %v1653 = vld [vmem:[%s3 + $0x24] sm:$0xf]
        %v1654 = vld [vmem:[%s3 + $0x28] sm:$0xf]
        %v1655 = vld [vmem:[%s3 + $0x2c] sm:$0xf]
        %v1656 = vld [vmem:[%s3 + $0x30] sm:$0xf]
        %v1657 = vld [vmem:[%s3 + $0x34] sm:$0xf]
        %v1658 = vld [vmem:[%s3 + $0x38] sm:$0xf]
        %v1659 = vld [vmem:[%s3 + $0x3c] sm:$0xf]
        %v1660 = vld [vmem:[%s3 + $0x40] sm:$0xf]
        %v1661 = vld [vmem:[%s3 + $0x44] sm:$0xf]
        %v1662 = vld [vmem:[%s3 + $0x48] sm:$0xf]
        %v1663 = vld [vmem:[%s3 + $0x4c] sm:$0xf]
        %v1664 = vld [vmem:[%s3 + $0x50] sm:$0xf]
        %v1665 = vld [vmem:[%s3 + $0x54] sm:$0xf]
        %v1666 = vld [vmem:[%s3 + $0x58] sm:$0xf]
        %v1667 = vld [vmem:[%s3 + $0x5c] sm:$0xf]
        %v1668 = vld [vmem:[%s3 + $0x60] sm:$0xf]
        %v1669 = vld [vmem:[%s3 + $0x64] sm:$0xf]
        %v1670 = vld [vmem:[%s3 + $0x68] sm:$0xf]
        %v1671 = vld [vmem:[%s3 + $0x6c] sm:$0xf]
        %v1672 = vld [vmem:[%s3 + $0x70] sm:$0xf]
        %v1673 = vld [vmem:[%s3 + $0x74] sm:$0xf]
        %v1674 = vld [vmem:[%s3 + $0x78] sm:$0xf]
        %v1675 = vld [vmem:[%s3 + $0x7c] sm:$0xf]
        %v1676 = vld [vmem:[%s4] sm:$0xff]
        %v1677 = vld [vmem:[%s4 + $0x8] sm:$0xff]
        %v1678 = vld [vmem:[%s4 + $0x10] sm:$0xff]
        %v1679 = vld [vmem:[%s4 + $0x18] sm:$0xff]
        %v1680 = vld [vmem:[%s4 + $0x20] sm:$0xff]
        %v1681 = vld [vmem:[%s4 + $0x28] sm:$0xff]
        %v1682 = vld [vmem:[%s4 + $0x30] sm:$0xff]
        %v1683 = vld [vmem:[%s4 + $0x38] sm:$0xff]
        %v1684 = vld [vmem:[%s4 + $0x40] sm:$0xff]
        %v1685 = vld [vmem:[%s4 + $0x48] sm:$0xff]
        %v1686 = vld [vmem:[%s4 + $0x50] sm:$0xff]
        %v1687 = vld [vmem:[%s4 + $0x58] sm:$0xff]
        %v1688 = vld [vmem:[%s4 + $0x60] sm:$0xff]
        %v1689 = vld [vmem:[%s4 + $0x68] sm:$0xff]
        %v1690 = vld [vmem:[%s4 + $0x70] sm:$0xff]
        %v1691 = vld [vmem:[%s4 + $0x78] sm:$0xff]
        %1693 = vset.pattern.permute.xlu0 0
        %1694 = vperm.xlu0 %1693, %v1676
        %v1695 = vpop.permute.xlu0 %1694
        %1698 = vset.pattern.permute.xlu0 0
        %1699 = vperm.xlu0 %1698, %v1677
        %v1700 = vpop.permute.xlu0 %1699
        %1703 = vset.pattern.permute.xlu0 0
        %1704 = vperm.xlu0 %1703, %v1678
        %v1705 = vpop.permute.xlu0 %1704
        %1708 = vset.pattern.permute.xlu0 0
        %1709 = vperm.xlu0 %1708, %v1679
        %v1710 = vpop.permute.xlu0 %1709
        %1713 = vset.pattern.permute.xlu0 0
        %1714 = vperm.xlu0 %1713, %v1680
        %v1715 = vpop.permute.xlu0 %1714
        %1718 = vset.pattern.permute.xlu0 0
        %1719 = vperm.xlu0 %1718, %v1681
        %v1720 = vpop.permute.xlu0 %1719
        %1723 = vset.pattern.permute.xlu0 0
        %1724 = vperm.xlu0 %1723, %v1682
        %v1725 = vpop.permute.xlu0 %1724
        %1728 = vset.pattern.permute.xlu0 0
        %1729 = vperm.xlu0 %1728, %v1683
        %v1730 = vpop.permute.xlu0 %1729
        %1733 = vset.pattern.permute.xlu0 0
        %1734 = vperm.xlu0 %1733, %v1684
        %v1735 = vpop.permute.xlu0 %1734
        %1738 = vset.pattern.permute.xlu0 0
        %1739 = vperm.xlu0 %1738, %v1685
        %v1740 = vpop.permute.xlu0 %1739
        %1743 = vset.pattern.permute.xlu0 0
        %1744 = vperm.xlu0 %1743, %v1686
        %v1745 = vpop.permute.xlu0 %1744
        %1748 = vset.pattern.permute.xlu0 0
        %1749 = vperm.xlu0 %1748, %v1687
        %v1750 = vpop.permute.xlu0 %1749
        %1753 = vset.pattern.permute.xlu0 0
        %1754 = vperm.xlu0 %1753, %v1688
        %v1755 = vpop.permute.xlu0 %1754
        %1758 = vset.pattern.permute.xlu0 0
        %1759 = vperm.xlu0 %1758, %v1689
        %v1760 = vpop.permute.xlu0 %1759
        %1763 = vset.pattern.permute.xlu0 0
        %1764 = vperm.xlu0 %1763, %v1690
        %v1765 = vpop.permute.xlu0 %1764
        %1768 = vset.pattern.permute.xlu0 0
        %1769 = vperm.xlu0 %1768, %v1691
        %v1770 = vpop.permute.xlu0 %1769
        %v1804 = vunpack.c.l.b16 %v1644
        %v1805 = vunpack.c.l.b16 %v1645
        %v1806 = vunpack.c.l.b16 %v1646
        %v1807 = vunpack.c.l.b16 %v1647
        %v1808 = vunpack.c.l.b16 %v1648
        %v1809 = vunpack.c.l.b16 %v1649
        %v1810 = vunpack.c.l.b16 %v1650
        %v1811 = vunpack.c.l.b16 %v1651
        %v1812 = vunpack.c.l.b16 %v1652
        %v1813 = vunpack.c.l.b16 %v1653
        %v1814 = vunpack.c.l.b16 %v1654
        %v1815 = vunpack.c.l.b16 %v1655
        %v1816 = vunpack.c.l.b16 %v1656
        %v1817 = vunpack.c.l.b16 %v1657
        %v1818 = vunpack.c.l.b16 %v1658
        %v1819 = vunpack.c.l.b16 %v1659
        %v1820 = vunpack.c.l.b16 %v1660
        %v1821 = vunpack.c.l.b16 %v1661
        %v1822 = vunpack.c.l.b16 %v1662
        %v1823 = vunpack.c.l.b16 %v1663
        %v1824 = vunpack.c.l.b16 %v1664
        %v1825 = vunpack.c.l.b16 %v1665
        %v1826 = vunpack.c.l.b16 %v1666
        %v1827 = vunpack.c.l.b16 %v1667
        %v1828 = vunpack.c.l.b16 %v1668
        %v1829 = vunpack.c.l.b16 %v1669
        %v1830 = vunpack.c.l.b16 %v1670
        %v1831 = vunpack.c.l.b16 %v1671
        %v1832 = vunpack.c.l.b16 %v1672
        %v1833 = vunpack.c.l.b16 %v1673
        %v1834 = vunpack.c.l.b16 %v1674
        %v1835 = vunpack.c.l.b16 %v1675
        %v1836 = vpack.c.b16 %v1805, %v1804
        %v1837 = vpack.c.b16 %v1807, %v1806
        %v1838 = vpack.c.b16 %v1809, %v1808
        %v1839 = vpack.c.b16 %v1811, %v1810
        %v1840 = vpack.c.b16 %v1813, %v1812
        %v1841 = vpack.c.b16 %v1815, %v1814
        %v1842 = vpack.c.b16 %v1817, %v1816
        %v1843 = vpack.c.b16 %v1819, %v1818
        %v1844 = vpack.c.b16 %v1821, %v1820
        %v1845 = vpack.c.b16 %v1823, %v1822
        %v1846 = vpack.c.b16 %v1825, %v1824
        %v1847 = vpack.c.b16 %v1827, %v1826
        %v1848 = vpack.c.b16 %v1829, %v1828
        %v1849 = vpack.c.b16 %v1831, %v1830
        %v1850 = vpack.c.b16 %v1833, %v1832
        %v1851 = vpack.c.b16 %v1835, %v1834
        %1868 = vxpose.xlu0.c.b16.start [1/8] %v1836, 128
        %1869 = vxpose.xlu0.c.b16.cont [2/8] %v1837, 128
        %1870 = vxpose.xlu0.c.b16.cont [3/8] %v1838, 128
        %1871 = vxpose.xlu0.c.b16.cont [4/8] %v1839, 128
        %1872 = vxpose.xlu0.c.b16.cont [5/8] %v1840, 128
        %1873 = vxpose.xlu0.c.b16.cont [6/8] %v1841, 128
        %1874 = vxpose.xlu0.c.b16.cont [7/8] %v1842, 128
        %1875 = vxpose.xlu0.c.b16.end [8/8] %v1843, 128
        %v1876 = vpop.trf.xlu0
        %v1877 = vpop.trf.xlu0
        %v1878 = vpop.trf.xlu0
        %v1879 = vpop.trf.xlu0
        %v1880 = vpop.trf.xlu0
        %v1881 = vpop.trf.xlu0
        %v1882 = vpop.trf.xlu0
        %v1883 = vpop.trf.xlu0
        %1884 = vxpose.xlu0.c.b16.start [1/8] %v1844, 128
        %1885 = vxpose.xlu0.c.b16.cont [2/8] %v1845, 128
        %1886 = vxpose.xlu0.c.b16.cont [3/8] %v1846, 128
        %1887 = vxpose.xlu0.c.b16.cont [4/8] %v1847, 128
        %1888 = vxpose.xlu0.c.b16.cont [5/8] %v1848, 128
        %1889 = vxpose.xlu0.c.b16.cont [6/8] %v1849, 128
        %1890 = vxpose.xlu0.c.b16.cont [7/8] %v1850, 128
        %1891 = vxpose.xlu0.c.b16.end [8/8] %v1851, 128
        %v1892 = vpop.trf.xlu0
        %v1893 = vpop.trf.xlu0
        %v1894 = vpop.trf.xlu0
        %v1895 = vpop.trf.xlu0
        %v1896 = vpop.trf.xlu0
        %v1897 = vpop.trf.xlu0
        %v1898 = vpop.trf.xlu0
        %v1899 = vpop.trf.xlu0
        %1900 = vmatprep.subr.bf16.mxu0 %v476
        %1901 = vmatpush1.bf16.msra.mxu0 %v475
        %1902 = vmatprep.subr.bf16.mxu0 %v472
        %1903 = vmatpush1.bf16.msra.mxu0 %v471
        %1904 = vmatprep.subr.bf16.mxu0 %v468
        %1905 = vmatpush1.bf16.msra.mxu0 %v467
        %1906 = vmatprep.subr.bf16.mxu0 %v464
        %1907 = vmatpush1.bf16.msra.mxu0 %v463
        %1908 = vmatprep.subr.bf16.mxu0 %v460
        %1909 = vmatpush1.bf16.msra.mxu0 %v459
        %1910 = vmatprep.subr.bf16.mxu0 %v456
        %1911 = vmatpush1.bf16.msra.mxu0 %v455
        %1912 = vmatprep.subr.bf16.mxu0 %v452
        %1913 = vmatpush1.bf16.msra.mxu0 %v451
        %1914 = vmatprep.subr.bf16.mxu0 %v448
        %1915 = vmatpush1.bf16.msra.mxu0 %v447
        %1916 = vmatprep.subr.bf16.mxu0 %v508
        %1917 = vmatpush2.bf16.msra.mxu0 %v507
        %1918 = vmatprep.subr.bf16.mxu0 %v504
        %1919 = vmatpush2.bf16.msra.mxu0 %v503
        %1920 = vmatprep.subr.bf16.mxu0 %v500
        %1921 = vmatpush2.bf16.msra.mxu0 %v499
        %1922 = vmatprep.subr.bf16.mxu0 %v496
        %1923 = vmatpush2.bf16.msra.mxu0 %v495
        %1924 = vmatprep.subr.bf16.mxu0 %v492
        %1925 = vmatpush2.bf16.msra.mxu0 %v491
        %1926 = vmatprep.subr.bf16.mxu0 %v488
        %1927 = vmatpush2.bf16.msra.mxu0 %v487
        %1928 = vmatprep.subr.bf16.mxu0 %v484
        %1929 = vmatpush2.bf16.msra.mxu0 %v483
        %1930 = vmatprep.subr.bf16.mxu0 %v480
        %1931 = vmatpush2.bf16.msra.mxu0 %v479
        %1932 = vmatprep.mubr.bf16.mxu0 %v1892
        %1933 = vmatmul.mubr.bf16.gmra.mxu0 %v1876
        %v1934 = vpop.f32.mrf.mxu0
        %v1935 = vadd.f32 %v1695, %v1934
        %v1936 = vpop.f32.mrf.mxu0
        %v1937 = vadd.f32 %v1695, %v1936
        %v1938 = vpop.f32.mrf.mxu0
        %v1939 = vadd.f32 %v1700, %v1938
        %v1940 = vpop.f32.mrf.mxu0
        %v1941 = vadd.f32 %v1700, %v1940
        %1942 = vmatprep.mubr.bf16.mxu0 %v1893
        %1943 = vmatmul.mubr.bf16.gmra.mxu0 %v1877
        %v1944 = vpop.f32.mrf.mxu0
        %v1945 = vadd.f32 %v1705, %v1944
        %v1946 = vpop.f32.mrf.mxu0
        %v1947 = vadd.f32 %v1705, %v1946
        %v1948 = vpop.f32.mrf.mxu0
        %v1949 = vadd.f32 %v1710, %v1948
        %v1950 = vpop.f32.mrf.mxu0
        %v1951 = vadd.f32 %v1710, %v1950
        %1952 = vmatprep.mubr.bf16.mxu0 %v1894
        %1953 = vmatmul.mubr.bf16.gmra.mxu0 %v1878
        %v1954 = vpop.f32.mrf.mxu0
        %v1955 = vadd.f32 %v1715, %v1954
        %v1956 = vpop.f32.mrf.mxu0
        %v1957 = vadd.f32 %v1715, %v1956
        %v1958 = vpop.f32.mrf.mxu0
        %v1959 = vadd.f32 %v1720, %v1958
        %v1960 = vpop.f32.mrf.mxu0
        %v1961 = vadd.f32 %v1720, %v1960
        %1962 = vmatprep.mubr.bf16.mxu0 %v1895
        %1963 = vmatmul.mubr.bf16.gmra.mxu0 %v1879
        %v1964 = vpop.f32.mrf.mxu0
        %v1965 = vadd.f32 %v1725, %v1964
        %v1966 = vpop.f32.mrf.mxu0
        %v1967 = vadd.f32 %v1725, %v1966
        %v1968 = vpop.f32.mrf.mxu0
        %v1969 = vadd.f32 %v1730, %v1968
        %v1970 = vpop.f32.mrf.mxu0
        %v1971 = vadd.f32 %v1730, %v1970
        %1972 = vmatprep.mubr.bf16.mxu0 %v1896
        %1973 = vmatmul.mubr.bf16.gmra.mxu0 %v1880
        %v1974 = vpop.f32.mrf.mxu0
        %v1975 = vadd.f32 %v1735, %v1974
        %v1976 = vpop.f32.mrf.mxu0
        %v1977 = vadd.f32 %v1735, %v1976
        %v1978 = vpop.f32.mrf.mxu0
        %v1979 = vadd.f32 %v1740, %v1978
        %v1980 = vpop.f32.mrf.mxu0
        %v1981 = vadd.f32 %v1740, %v1980
        %1982 = vmatprep.mubr.bf16.mxu0 %v1897
        %1983 = vmatmul.mubr.bf16.gmra.mxu0 %v1881
        %v1984 = vpop.f32.mrf.mxu0
        %v1985 = vadd.f32 %v1745, %v1984
        %v1986 = vpop.f32.mrf.mxu0
        %v1987 = vadd.f32 %v1745, %v1986
        %v1988 = vpop.f32.mrf.mxu0
        %v1989 = vadd.f32 %v1750, %v1988
        %v1990 = vpop.f32.mrf.mxu0
        %v1991 = vadd.f32 %v1750, %v1990
        %1992 = vmatprep.mubr.bf16.mxu0 %v1898
        %1993 = vmatmul.mubr.bf16.gmra.mxu0 %v1882
        %v1994 = vpop.f32.mrf.mxu0
        %v1995 = vadd.f32 %v1755, %v1994
        %v1996 = vpop.f32.mrf.mxu0
        %v1997 = vadd.f32 %v1755, %v1996
        %v1998 = vpop.f32.mrf.mxu0
        %v1999 = vadd.f32 %v1760, %v1998
        %v2000 = vpop.f32.mrf.mxu0
        %v2001 = vadd.f32 %v1760, %v2000
        %2002 = vmatprep.mubr.bf16.mxu0 %v1899
        %2003 = vmatmul.mubr.bf16.gmra.mxu0 %v1883
        %v2004 = vpop.f32.mrf.mxu0
        %v2005 = vadd.f32 %v1765, %v2004
        %v2006 = vpop.f32.mrf.mxu0
        %v2007 = vadd.f32 %v1765, %v2006
        %v2008 = vpop.f32.mrf.mxu0
        %v2009 = vadd.f32 %v1770, %v2008
        %v2010 = vpop.f32.mrf.mxu0
        %v2011 = vadd.f32 %v1770, %v2010
        %2012 = vdwg.mxu0
        %2013 = vmatprep.subr.bf16.mxu0 %v478
        %2014 = vmatpush1.bf16.msra.mxu0 %v477
        %2015 = vmatprep.subr.bf16.mxu0 %v474
        %2016 = vmatpush1.bf16.msra.mxu0 %v473
        %2017 = vmatprep.subr.bf16.mxu0 %v470
        %2018 = vmatpush1.bf16.msra.mxu0 %v469
        %2019 = vmatprep.subr.bf16.mxu0 %v466
        %2020 = vmatpush1.bf16.msra.mxu0 %v465
        %2021 = vmatprep.subr.bf16.mxu0 %v462
        %2022 = vmatpush1.bf16.msra.mxu0 %v461
        %2023 = vmatprep.subr.bf16.mxu0 %v458
        %2024 = vmatpush1.bf16.msra.mxu0 %v457
        %2025 = vmatprep.subr.bf16.mxu0 %v454
        %2026 = vmatpush1.bf16.msra.mxu0 %v453
        %2027 = vmatprep.subr.bf16.mxu0 %v450
        %2028 = vmatpush1.bf16.msra.mxu0 %v449
        %2029 = vmatprep.subr.bf16.mxu0 %v510
        %2030 = vmatpush2.bf16.msra.mxu0 %v509
        %2031 = vmatprep.subr.bf16.mxu0 %v506
        %2032 = vmatpush2.bf16.msra.mxu0 %v505
        %2033 = vmatprep.subr.bf16.mxu0 %v502
        %2034 = vmatpush2.bf16.msra.mxu0 %v501
        %2035 = vmatprep.subr.bf16.mxu0 %v498
        %2036 = vmatpush2.bf16.msra.mxu0 %v497
        %2037 = vmatprep.subr.bf16.mxu0 %v494
        %2038 = vmatpush2.bf16.msra.mxu0 %v493
        %2039 = vmatprep.subr.bf16.mxu0 %v490
        %2040 = vmatpush2.bf16.msra.mxu0 %v489
        %2041 = vmatprep.subr.bf16.mxu0 %v486
        %2042 = vmatpush2.bf16.msra.mxu0 %v485
        %2043 = vmatprep.subr.bf16.mxu0 %v482
        %2044 = vmatpush2.bf16.msra.mxu0 %v481
        %2045 = vmatprep.mubr.bf16.mxu0 %v1892
        %2046 = vmatmul.mubr.bf16.gmra.mxu0 %v1876
        %v2047 = vpop.f32.mrf.mxu0
        %v2048 = vadd.f32 %v1695, %v2047
        %v2049 = vpop.f32.mrf.mxu0
        %v2050 = vadd.f32 %v1695, %v2049
        %v2051 = vpop.f32.mrf.mxu0
        %v2052 = vadd.f32 %v1700, %v2051
        %v2053 = vpop.f32.mrf.mxu0
        %v2054 = vadd.f32 %v1700, %v2053
        %2055 = vmatprep.mubr.bf16.mxu0 %v1893
        %2056 = vmatmul.mubr.bf16.gmra.mxu0 %v1877
        %v2057 = vpop.f32.mrf.mxu0
        %v2058 = vadd.f32 %v1705, %v2057
        %v2059 = vpop.f32.mrf.mxu0
        %v2060 = vadd.f32 %v1705, %v2059
        %v2061 = vpop.f32.mrf.mxu0
        %v2062 = vadd.f32 %v1710, %v2061
        %v2063 = vpop.f32.mrf.mxu0
        %v2064 = vadd.f32 %v1710, %v2063
        %2065 = vmatprep.mubr.bf16.mxu0 %v1894
        %2066 = vmatmul.mubr.bf16.gmra.mxu0 %v1878
        %v2067 = vpop.f32.mrf.mxu0
        %v2068 = vadd.f32 %v1715, %v2067
        %v2069 = vpop.f32.mrf.mxu0
        %v2070 = vadd.f32 %v1715, %v2069
        %v2071 = vpop.f32.mrf.mxu0
        %v2072 = vadd.f32 %v1720, %v2071
        %v2073 = vpop.f32.mrf.mxu0
        %v2074 = vadd.f32 %v1720, %v2073
        %2075 = vmatprep.mubr.bf16.mxu0 %v1895
        %2076 = vmatmul.mubr.bf16.gmra.mxu0 %v1879
        %v2077 = vpop.f32.mrf.mxu0
        %v2078 = vadd.f32 %v1725, %v2077
        %v2079 = vpop.f32.mrf.mxu0
        %v2080 = vadd.f32 %v1725, %v2079
        %v2081 = vpop.f32.mrf.mxu0
        %v2082 = vadd.f32 %v1730, %v2081
        %v2083 = vpop.f32.mrf.mxu0
        %v2084 = vadd.f32 %v1730, %v2083
        %2085 = vmatprep.mubr.bf16.mxu0 %v1896
        %2086 = vmatmul.mubr.bf16.gmra.mxu0 %v1880
        %v2087 = vpop.f32.mrf.mxu0
        %v2088 = vadd.f32 %v1735, %v2087
        %v2089 = vpop.f32.mrf.mxu0
        %v2090 = vadd.f32 %v1735, %v2089
        %v2091 = vpop.f32.mrf.mxu0
        %v2092 = vadd.f32 %v1740, %v2091
        %v2093 = vpop.f32.mrf.mxu0
        %v2094 = vadd.f32 %v1740, %v2093
        %2095 = vmatprep.mubr.bf16.mxu0 %v1897
        %2096 = vmatmul.mubr.bf16.gmra.mxu0 %v1881
        %v2097 = vpop.f32.mrf.mxu0
        %v2098 = vadd.f32 %v1745, %v2097
        %v2099 = vpop.f32.mrf.mxu0
        %v2100 = vadd.f32 %v1745, %v2099
        %v2101 = vpop.f32.mrf.mxu0
        %v2102 = vadd.f32 %v1750, %v2101
        %v2103 = vpop.f32.mrf.mxu0
        %v2104 = vadd.f32 %v1750, %v2103
        %2105 = vmatprep.mubr.bf16.mxu0 %v1898
        %2106 = vmatmul.mubr.bf16.gmra.mxu0 %v1882
        %v2107 = vpop.f32.mrf.mxu0
        %v2108 = vadd.f32 %v1755, %v2107
        %v2109 = vpop.f32.mrf.mxu0
        %v2110 = vadd.f32 %v1755, %v2109
        %v2111 = vpop.f32.mrf.mxu0
        %v2112 = vadd.f32 %v1760, %v2111
        %v2113 = vpop.f32.mrf.mxu0
        %v2114 = vadd.f32 %v1760, %v2113
        %2115 = vmatprep.mubr.bf16.mxu0 %v1899
        %2116 = vmatmul.mubr.bf16.gmra.mxu0 %v1883
        %v2117 = vpop.f32.mrf.mxu0
        %v2118 = vadd.f32 %v1765, %v2117
        %v2119 = vpop.f32.mrf.mxu0
        %v2120 = vadd.f32 %v1765, %v2119
        %v2121 = vpop.f32.mrf.mxu0
        %v2122 = vadd.f32 %v1770, %v2121
        %v2123 = vpop.f32.mrf.mxu0
        %v2124 = vadd.f32 %v1770, %v2123
        %2125 = vdwg.mxu0
        %v2126 = vpack.c.bf16 %v1939, %v1935
        %v2127 = vpack.c.bf16 %v1941, %v1937
        %v2128 = vpack.c.bf16 %v2052, %v2048
        %v2129 = vpack.c.bf16 %v2054, %v2050
        %v2130 = vpack.c.bf16 %v1949, %v1945
        %v2131 = vpack.c.bf16 %v1951, %v1947
        %v2132 = vpack.c.bf16 %v2062, %v2058
        %v2133 = vpack.c.bf16 %v2064, %v2060
        %v2134 = vpack.c.bf16 %v1959, %v1955
        %v2135 = vpack.c.bf16 %v1961, %v1957
        %v2136 = vpack.c.bf16 %v2072, %v2068
        %v2137 = vpack.c.bf16 %v2074, %v2070
        %v2138 = vpack.c.bf16 %v1969, %v1965
        %v2139 = vpack.c.bf16 %v1971, %v1967
        %v2140 = vpack.c.bf16 %v2082, %v2078
        %v2141 = vpack.c.bf16 %v2084, %v2080
        %v2142 = vpack.c.bf16 %v1979, %v1975
        %v2143 = vpack.c.bf16 %v1981, %v1977
        %v2144 = vpack.c.bf16 %v2092, %v2088
        %v2145 = vpack.c.bf16 %v2094, %v2090
        %v2146 = vpack.c.bf16 %v1989, %v1985
        %v2147 = vpack.c.bf16 %v1991, %v1987
        %v2148 = vpack.c.bf16 %v2102, %v2098
        %v2149 = vpack.c.bf16 %v2104, %v2100
        %v2150 = vpack.c.bf16 %v1999, %v1995
        %v2151 = vpack.c.bf16 %v2001, %v1997
        %v2152 = vpack.c.bf16 %v2112, %v2108
        %v2153 = vpack.c.bf16 %v2114, %v2110
        %v2154 = vpack.c.bf16 %v2009, %v2005
        %v2155 = vpack.c.bf16 %v2011, %v2007
        %v2156 = vpack.c.bf16 %v2122, %v2118
        %v2157 = vpack.c.bf16 %v2124, %v2120
        %v2190 = vunpack.c.l.b16 %v2126
        %v2191 = vunpack.c.l.b16 %v2127
        %v2192 = vunpack.c.l.b16 %v2128
        %v2193 = vunpack.c.l.b16 %v2129
        %v2194 = vunpack.c.h.b16 %v2126
        %v2195 = vunpack.c.h.b16 %v2127
        %v2196 = vunpack.c.h.b16 %v2128
        %v2197 = vunpack.c.h.b16 %v2129
        %v2198 = vunpack.c.l.b16 %v2130
        %v2199 = vunpack.c.l.b16 %v2131
        %v2200 = vunpack.c.l.b16 %v2132
        %v2201 = vunpack.c.l.b16 %v2133
        %v2202 = vunpack.c.h.b16 %v2130
        %v2203 = vunpack.c.h.b16 %v2131
        %v2204 = vunpack.c.h.b16 %v2132
        %v2205 = vunpack.c.h.b16 %v2133
        %v2206 = vunpack.c.l.b16 %v2134
        %v2207 = vunpack.c.l.b16 %v2135
        %v2208 = vunpack.c.l.b16 %v2136
        %v2209 = vunpack.c.l.b16 %v2137
        %v2210 = vunpack.c.h.b16 %v2134
        %v2211 = vunpack.c.h.b16 %v2135
        %v2212 = vunpack.c.h.b16 %v2136
        %v2213 = vunpack.c.h.b16 %v2137
        %v2214 = vunpack.c.l.b16 %v2138
        %v2215 = vunpack.c.l.b16 %v2139
        %v2216 = vunpack.c.l.b16 %v2140
        %v2217 = vunpack.c.l.b16 %v2141
        %v2218 = vunpack.c.h.b16 %v2138
        %v2219 = vunpack.c.h.b16 %v2139
        %v2220 = vunpack.c.h.b16 %v2140
        %v2221 = vunpack.c.h.b16 %v2141
        %v2222 = vunpack.c.l.b16 %v2142
        %v2223 = vunpack.c.l.b16 %v2143
        %v2224 = vunpack.c.l.b16 %v2144
        %v2225 = vunpack.c.l.b16 %v2145
        %v2226 = vunpack.c.h.b16 %v2142
        %v2227 = vunpack.c.h.b16 %v2143
        %v2228 = vunpack.c.h.b16 %v2144
        %v2229 = vunpack.c.h.b16 %v2145
        %v2230 = vunpack.c.l.b16 %v2146
        %v2231 = vunpack.c.l.b16 %v2147
        %v2232 = vunpack.c.l.b16 %v2148
        %v2233 = vunpack.c.l.b16 %v2149
        %v2234 = vunpack.c.h.b16 %v2146
        %v2235 = vunpack.c.h.b16 %v2147
        %v2236 = vunpack.c.h.b16 %v2148
        %v2237 = vunpack.c.h.b16 %v2149
        %v2238 = vunpack.c.l.b16 %v2150
        %v2239 = vunpack.c.l.b16 %v2151
        %v2240 = vunpack.c.l.b16 %v2152
        %v2241 = vunpack.c.l.b16 %v2153
        %v2242 = vunpack.c.h.b16 %v2150
        %v2243 = vunpack.c.h.b16 %v2151
        %v2244 = vunpack.c.h.b16 %v2152
        %v2245 = vunpack.c.h.b16 %v2153
        %v2246 = vunpack.c.l.b16 %v2154
        %v2247 = vunpack.c.l.b16 %v2155
        %v2248 = vunpack.c.l.b16 %v2156
        %v2249 = vunpack.c.l.b16 %v2157
        %v2250 = vunpack.c.h.b16 %v2154
        %v2251 = vunpack.c.h.b16 %v2155
        %v2252 = vunpack.c.h.b16 %v2156
        %v2253 = vunpack.c.h.b16 %v2157
        %v2254 = vpack.c.b16 %v2191, %v2190
        %v2255 = vpack.c.b16 %v2193, %v2192
        %v2256 = vpack.c.b16 %v2195, %v2194
        %v2257 = vpack.c.b16 %v2197, %v2196
        %v2258 = vpack.c.b16 %v2199, %v2198
        %v2259 = vpack.c.b16 %v2201, %v2200
        %v2260 = vpack.c.b16 %v2203, %v2202
        %v2261 = vpack.c.b16 %v2205, %v2204
        %v2262 = vpack.c.b16 %v2207, %v2206
        %v2263 = vpack.c.b16 %v2209, %v2208
        %v2264 = vpack.c.b16 %v2211, %v2210
        %v2265 = vpack.c.b16 %v2213, %v2212
        %v2266 = vpack.c.b16 %v2215, %v2214
        %v2267 = vpack.c.b16 %v2217, %v2216
        %v2268 = vpack.c.b16 %v2219, %v2218
        %v2269 = vpack.c.b16 %v2221, %v2220
        %v2270 = vpack.c.b16 %v2223, %v2222
        %v2271 = vpack.c.b16 %v2225, %v2224
        %v2272 = vpack.c.b16 %v2227, %v2226
        %v2273 = vpack.c.b16 %v2229, %v2228
        %v2274 = vpack.c.b16 %v2231, %v2230
        %v2275 = vpack.c.b16 %v2233, %v2232
        %v2276 = vpack.c.b16 %v2235, %v2234
        %v2277 = vpack.c.b16 %v2237, %v2236
        %v2278 = vpack.c.b16 %v2239, %v2238
        %v2279 = vpack.c.b16 %v2241, %v2240
        %v2280 = vpack.c.b16 %v2243, %v2242
        %v2281 = vpack.c.b16 %v2245, %v2244
        %v2282 = vpack.c.b16 %v2247, %v2246
        %v2283 = vpack.c.b16 %v2249, %v2248
        %v2284 = vpack.c.b16 %v2251, %v2250
        %v2285 = vpack.c.b16 %v2253, %v2252
        %2318 = vst [vmem:[%s315] sm:$0xff] %v2254
        %2319 = vst [vmem:[%s315 + $0x8] sm:$0xff] %v2255
        %2320 = vst [vmem:[%s315 + $0x10] sm:$0xff] %v2256
        %2321 = vst [vmem:[%s315 + $0x18] sm:$0xff] %v2257
        %2322 = vst [vmem:[%s315 + $0x20] sm:$0xff] %v2258
        %2323 = vst [vmem:[%s315 + $0x28] sm:$0xff] %v2259
        %2324 = vst [vmem:[%s315 + $0x30] sm:$0xff] %v2260
        %2325 = vst [vmem:[%s315 + $0x38] sm:$0xff] %v2261
        %2326 = vst [vmem:[%s315 + $0x40] sm:$0xff] %v2262
        %2327 = vst [vmem:[%s315 + $0x48] sm:$0xff] %v2263
        %2328 = vst [vmem:[%s315 + $0x50] sm:$0xff] %v2264
        %2329 = vst [vmem:[%s315 + $0x58] sm:$0xff] %v2265
        %2330 = vst [vmem:[%s315 + $0x60] sm:$0xff] %v2266
        %2331 = vst [vmem:[%s315 + $0x68] sm:$0xff] %v2267
        %2332 = vst [vmem:[%s315 + $0x70] sm:$0xff] %v2268
        %2333 = vst [vmem:[%s315 + $0x78] sm:$0xff] %v2269
        %2334 = vst [vmem:[%s315 + $0x80] sm:$0xff] %v2270
        %2335 = vst [vmem:[%s315 + $0x88] sm:$0xff] %v2271
        %2336 = vst [vmem:[%s315 + $0x90] sm:$0xff] %v2272
        %2337 = vst [vmem:[%s315 + $0x98] sm:$0xff] %v2273
        %2338 = vst [vmem:[%s315 + $0xa0] sm:$0xff] %v2274
        %2339 = vst [vmem:[%s315 + $0xa8] sm:$0xff] %v2275
        %2340 = vst [vmem:[%s315 + $0xb0] sm:$0xff] %v2276
        %2341 = vst [vmem:[%s315 + $0xb8] sm:$0xff] %v2277
        %2342 = vst [vmem:[%s315 + $0xc0] sm:$0xff] %v2278
        %2343 = vst [vmem:[%s315 + $0xc8] sm:$0xff] %v2279
        %2344 = vst [vmem:[%s315 + $0xd0] sm:$0xff] %v2280
        %2345 = vst [vmem:[%s315 + $0xd8] sm:$0xff] %v2281
        %2346 = vst [vmem:[%s315 + $0xe0] sm:$0xff] %v2282
        %2347 = vst [vmem:[%s315 + $0xe8] sm:$0xff] %v2283
        %2348 = vst [vmem:[%s315 + $0xf0] sm:$0xff] %v2284
        %2349 = vst [vmem:[%s315 + $0xf8] sm:$0xff] %v2285
        %s2350 = sand.u32 %s162, 1
        %s2351 = scalar_lea.sflag [#allocation4], %s2350
        %s2352 = sand.u32 %s162, 1
        %s2353 = smul.addr %s2352, 512
        %s2354 = scalar_lea.vmem [#allocation7], %s2353
        %s2355 = sand.u32 %s190, 1
        %s2356 = scalar_lea.sflag [#allocation9], %s2355
        %s2357 = sand.u32 %s190, 1
        %s2358 = smul.addr %s2357, 256
        %s2359 = scalar_lea.vmem [#allocation8], %s2358
        // Predicated region
        $region49: #{tpu_custom_call.1} parent=39 // pred_check
          %p2360 = pneg %p172
        $region50: #{tpu_custom_call.1} parent=39 // pred_check_branch
          %2362 = sbr.rel (%p2360) target = $region52
        $region51: #{tpu_custom_call.1} parent=39 // pred_region
          %s2363 = smul.u32 64, %s33
          %s2365 = ssub.s32 8192, 8192
          %2366 = vsyncadd %s2351, %s2365
          %s2367 = smul.addr %s2363, 2
          %s2368 = smul.addr %s32, 128
          %s2369 = sadd.s32 %s2367, %s2368
          %s2370 = smul.addr %s2369, 64
          %s2371 = scalar_lea.hbm %s5, %s2370
          %s2372 = sshll.u32 %s2354, 4
          %s2373 = int_to_ptr.vmem [resolvable:$true] %s2372
          %2378 = dma.vmem_to_hbm [thread:$0]  %s2373, 8192, %s2371, %s2351, 128, 128, 8
        $region52: #{tpu_custom_call.1} parent=39 // pred_fallthru
          _
        // Predicated region
        $region53: #{tpu_custom_call.1} parent=39 // pred_check
          %p2379 = pneg %p200
        $region54: #{tpu_custom_call.1} parent=39 // pred_check_branch
          %2381 = sbr.rel (%p2379) target = $region56
        $region55: #{tpu_custom_call.1} parent=39 // pred_region
          %s2382 = smul.u32 4, %s33
          %s2384 = ssub.s32 4096, 4096
          %2385 = vsyncadd %s2356, %s2384
          %s2386 = smul.addr %s32, 64
          %s2387 = sadd.s32 %s2382, %s2386
          %s2388 = smul.addr %s2387, 64
          %s2389 = scalar_lea.hbm %s6, %s2388
          %s2390 = sshll.u32 %s2359, 4
          %s2391 = int_to_ptr.vmem [resolvable:$true] %s2390
          %2396 = dma.vmem_to_hbm [thread:$0]  %s2391, 4096, %s2389, %s2356, 256, 256, 16
        $region56: #{tpu_custom_call.1} parent=39 // pred_fallthru
          _
      $region40: #{tpu_custom_call.1} parent=5 // pred_fallthru
        _
      %p2397 = scmp.le.s32.totalorder 2, %s23
      // Predicated region
      $region57: #{tpu_custom_call.1} parent=5 // pred_check
        %p2398 = pneg %p2397
      $region58: #{tpu_custom_call.1} parent=5 // pred_check_branch
        %2400 = sbr.rel (%p2398) target = $region60
      $region59: #{tpu_custom_call.1} parent=5 // pred_region
        %s2401 = ssub.s32 %s23, 2
        // Predicated region
        $region61: #{tpu_custom_call.1} parent=59 // pred_check
          %p2402 = pneg %p178
        $region62: #{tpu_custom_call.1} parent=59 // pred_check_branch
          %2404 = sbr.rel (%p2402) target = $region64
        $region63: #{tpu_custom_call.1} parent=59 // pred_region
          %s2405 = sand.u32 %s163, 1
          %s2406 = scalar_lea.sflag [#allocation4], %s2405
          %s2407 = sand.u32 %s163, 1
          %s2408 = smul.addr %s2407, 512
          %s2409 = scalar_lea.vmem [#allocation7], %s2408
          %2410 = dma.done %s2406, 8192
        $region64: #{tpu_custom_call.1} parent=59 // pred_fallthru
          _
        // Predicated region
        $region65: #{tpu_custom_call.1} parent=59 // pred_check
          %p2411 = pneg %p206
        $region66: #{tpu_custom_call.1} parent=59 // pred_check_branch
          %2413 = sbr.rel (%p2411) target = $region68
        $region67: #{tpu_custom_call.1} parent=59 // pred_region
          %s2414 = sand.u32 %s191, 1
          %s2415 = scalar_lea.sflag [#allocation9], %s2414
          %s2416 = sand.u32 %s191, 1
          %s2417 = smul.addr %s2416, 256
          %s2418 = scalar_lea.vmem [#allocation8], %s2417
          %2419 = dma.done %s2415, 4096
        $region68: #{tpu_custom_call.1} parent=59 // pred_fallthru
          _
      $region60: #{tpu_custom_call.1} parent=5 // pred_fallthru
        _
    $region6: #{tpu_custom_call.1} parent=1 // loop_footer
      %s27 = sadd.s32 1, %s23
    $region7: #{tpu_custom_call.1} parent=1 // loop_footer_branch
      %22 = sbr.rel target = $region3
    $region8: #{tpu_custom_call.1} parent=1 // loop_exit
      _
    %2420 = vsyncpa [#allocation3], 1
    %s2421 = scalar_lea.sflag [#allocation3], 1
    %2422 = vsyncpa %s2421, 1
    %2423 = vsyncpa [#allocation6], 1
    %2424 = vsyncpa [#allocation4], 1
    %s2425 = scalar_lea.sflag [#allocation4], 1
    %2426 = vsyncpa %s2425, 1
    %2427 = vsyncpa [#allocation9], 1
    %s2428 = scalar_lea.sflag [#allocation9], 1
    %2429 = vsyncpa %s2428, 1

</llo_original>
